<compile_context>
chip_gen: v7x
topology: tpu7x:2x2x1
jax: 0.10.0
libtpu: 0.0.40
codegen_flags: <defaults>
</compile_context>

<pallas_src>
import jax
import jax.numpy as jnp
from jax import lax
from jax.experimental import pallas as pl
from jax.experimental.pallas import tpu as pltpu

EPS = 1e-5            # BatchNorm1d eps (PyTorch default)
SLOPE = 0.01          # LeakyReLU default negative_slope
HIDDEN = (256, 128, 64)


def _round_up(n, m):
    return ((n + m - 1) // m) * m


# ------------------------------ fused kernel ---------------------------------
def _mlp_kernel(x_ref, w1_ref, p1_ref, w2_ref, p2_ref, w3_ref, p3_ref,
                w4_ref, b4_ref, o_ref):
    """(Linear + folded-BN + LeakyReLU) x3, then Linear(64->1), one row block.

    w*_ref : (in, out) bf16 weights (pre-transposed, lane-dense outputs).
    p*_ref : (2, out) f32 — row 0 = BN scale, row 1 = bias/BN shift.
    w4_ref : (8, 64) bf16 — final weight row in row 0, zeros elsewhere.
    b4_ref : (1, 1) f32 scalar in SMEM.
    o_ref  : (1, 8, block_rows) f32 — row 0 holds the real outputs.
    """
    cdt = w1_ref.dtype   # matmul operand dtype (bf16 — MXU native)

    def layer(h, w_ref, p_ref):
        z = jnp.dot(h.astype(cdt), w_ref[...],
                    preferred_element_type=jnp.float32)         # MXU, f32 acc
        z = z * p_ref[0:1, :] + p_ref[1:2, :]                   # folded BN (f32 VPU)
        return jnp.where(z >= 0.0, z, SLOPE * z)                # LeakyReLU
        # Dropout: identity in eval mode.

    h = layer(x_ref[...], w1_ref, p1_ref)      # in-kernel f32 -> bf16 cast of x
    h = layer(h, w2_ref, p2_ref)
    h = layer(h, w3_ref, p3_ref)

    # Final Linear computed as W4_pad @ h^T (transposed-RHS contraction) so
    # the result is lane-dense: (8, 64) x (block_rows, 64)^T -> (8, block_rows).
    o = lax.dot_general(w4_ref[...], h.astype(cdt),
                        dimension_numbers=(((1,), (1,)), ((), ())),
                        preferred_element_type=jnp.float32)
    o_ref[0] = (o + b4_ref[0, 0]).astype(o_ref.dtype)


# ------------------------------ wrapper ---------------------------------------
def _bn_scale_shift(b, gamma, beta, mean, var):
    """Inference-mode BN + linear bias folded into per-channel f32 scale/shift."""
    scale = gamma / jnp.sqrt(var + EPS)
    shift = scale * (b - mean) + beta
    return jnp.stack([scale, shift]).astype(jnp.float32)        # (2, out)


def regression_head_forward(x, p, *, block_rows=256, compute_dtype=jnp.bfloat16):
    """Eval-mode RegressionHead forward. x: (N, D) f32 -> (N, 1) f32.

    block_rows: rows per grid step. Keep it a multiple of 256 on v6e/v7x
    (2x256^2 MXU; 128 suffices on v5e); 256–1024 keeps >=2 grid steps per
    v7x TensorCore for realistic batches while staying far under VMEM limits.
    It is clamped automatically for small batches.
    """
    N, D = x.shape
    assert block_rows > 0 and block_rows % 8 == 0
    d1, d2, d3 = HIDDEN

    br = min(block_rows, _round_up(N, 8))       # don't use a tile >> batch
    nblocks = pl.cdiv(N, br)                    # ragged last block — no jnp.pad

    # Pre-transposed bf16 weights (in, out).
    w1 = p['W1'].T.astype(compute_dtype)                        # (D, 256)
    w2 = p['W2'].T.astype(compute_dtype)                        # (256, 128)
    w3 = p['W3'].T.astype(compute_dtype)                        # (128, 64)
    # Final 64->1 weight padded to 8 rows -> kernel writes a full lane-dense
    # (8, block_rows) output tile; row 0 is the real output.
    w4 = jnp.zeros((8, d3), compute_dtype).at[0].set(p['W4'][0].astype(compute_dtype))
    b4 = p['b4'].reshape(1, 1).astype(jnp.float32)

    p1 = _bn_scale_shift(p['b1'], p['bn1_gamma'], p['bn1_beta'], p['bn1_mean'], p['bn1_var'])
    p2 = _bn_scale_shift(p['b2'], p['bn2_gamma'], p['bn2_beta'], p['bn2_mean'], p['bn2_var'])
    p3 = _bn_scale_shift(p['b3'], p['bn3_gamma'], p['bn3_beta'], p['bn3_mean'], p['bn3_var'])

    weight_bytes = 2 * (D * d1 + d1 * d2 + d2 * d3 + 8 * d3) + 4 * 2 * (d1 + d2 + d3) + 4
    flops = 2 * N * (D * d1 + d1 * d2 + d2 * d3 + d3)

    out = pl.pallas_call(
        _mlp_kernel,
        out_shape=jax.ShapeDtypeStruct((nblocks, 8, br), jnp.float32),
        grid=(nblocks,),
        in_specs=[
            pl.BlockSpec((br, D), lambda i: (i, 0)),            # x rows (f32, cast in-kernel)
            pl.BlockSpec((D, d1), lambda i: (0, 0)),            # W1
            pl.BlockSpec((2, d1), lambda i: (0, 0)),            # BN1 scale/shift
            pl.BlockSpec((d1, d2), lambda i: (0, 0)),           # W2
            pl.BlockSpec((2, d2), lambda i: (0, 0)),            # BN2 scale/shift
            pl.BlockSpec((d2, d3), lambda i: (0, 0)),           # W3
            pl.BlockSpec((2, d3), lambda i: (0, 0)),            # BN3 scale/shift
            pl.BlockSpec((8, d3), lambda i: (0, 0)),            # W4 (zero-padded rows)
            pl.BlockSpec(memory_space=pltpu.MemorySpace.SMEM),  # b4 scalar
        ],
        out_specs=pl.BlockSpec((1, 8, br), lambda i: (i, 0, 0)),
        compiler_params=pltpu.CompilerParams(
            dimension_semantics=("parallel",),
            vmem_limit_bytes=32 * 1024 * 1024),
        cost_estimate=pl.CostEstimate(
            flops=flops, transcendentals=0,
            bytes_accessed=N * D * 4 + weight_bytes + nblocks * 8 * br * 4),
    )(x, w1, p1, w2, p2, w3, p3, w4, b4)

    # Row 0 of each (8, br) tile holds the real outputs; drop the ragged tail.
    return out[:, 0, :].reshape(-1)[:N].reshape(N, 1)


# --------------------------- plain-JAX reference ------------------------------
def ref_forward(x, p):
    hp = lax.Precision.HIGHEST
    h = x
    for i in range(1, 4):                              # three Linear+BN+LeakyReLU blocks
        h = jnp.dot(h, p[f'W{i}'].T, precision=hp) + p[f'b{i}']
        h = ((h - p[f'bn{i}_mean']) / jnp.sqrt(p[f'bn{i}_var'] + EPS)
             * p[f'bn{i}_gamma'] + p[f'bn{i}_beta'])
        h = jnp.where(h >= 0.0, h, SLOPE * h)
        # Dropout: identity in eval mode
    return jnp.dot(h, p['W4'].T, precision=hp) + p['b4']


# ------------------------ deterministic parameter init ------------------------
def init_params(key, input_dim):
    dims = (input_dim,) + HIDDEN + (1,)
    ks = jax.random.split(key, 16)
    f32 = jnp.float32
    p = {}
    for li, (din, dout) in enumerate(zip(dims[:-1], dims[1:]), start=1):
        bound = 1.0 / (din ** 0.5)
        p[f'W{li}'] = jax.random.uniform(ks[2 * li - 2], (dout, din), f32, -bound, bound)
        p[f'b{li}'] = jax.random.uniform(ks[2 * li - 1], (dout,), f32, -bound, bound)
    kbn = jax.random.split(ks[-1], 12)
    for i, dout in enumerate(HIDDEN, start=1):
        base = 4 * (i - 1)
        p[f'bn{i}_gamma'] = 1.0 + 0.1 * jax.random.normal(kbn[base + 0], (dout,), f32)
        p[f'bn{i}_beta'] = 0.1 * jax.random.normal(kbn[base + 1], (dout,), f32)
        p[f'bn{i}_mean'] = 0.1 * jax.random.normal(kbn[base + 2], (dout,), f32)
        p[f'bn{i}_var'] = 1.0 + 0.1 * jnp.abs(jax.random.normal(kbn[base + 3], (dout,), f32))
    return p


if __name__ == "__main__":
    # 272 rows -> 2 grid steps at block_rows=256 (second block ragged),
    # exercising the tiled + ragged-tail paths at a small size.
    N, input_dim = 272, 128
    key = jax.random.PRNGKey(0)
    kx, kp = jax.random.split(key)
    x = jax.random.normal(kx, (N, input_dim), jnp.float32)
    params = init_params(kp, input_dim)

    out = jax.block_until_ready(regression_head_forward(x, params))
    ref = jax.block_until_ready(ref_forward(x, params))
    assert out.shape == (N, 1)
    # bf16 MXU operands vs f32 reference -> ~1e-2-level differences expected.
    if not jnp.allclose(out, ref, rtol=3e-2, atol=3e-2):
        err = float(jnp.max(jnp.abs(out - ref)))
        raise AssertionError(f"Pallas output mismatch vs plain-JAX reference (max |err|={err})")
    print("KERNEL_OK")
</pallas_src>

<mosaic_0001>
module attributes {stable_mosaic.version = 11 : i64} {
  func.func @_mlp_kernel(%arg0: i32, %arg1: memref<256x128xf32, #tpu.memory_space<vmem>>, %arg2: memref<128x256xbf16, #tpu.memory_space<vmem>>, %arg3: memref<2x256xf32, #tpu.memory_space<vmem>>, %arg4: memref<256x128xbf16, #tpu.memory_space<vmem>>, %arg5: memref<2x128xf32, #tpu.memory_space<vmem>>, %arg6: memref<128x64xbf16, #tpu.memory_space<vmem>>, %arg7: memref<2x64xf32, #tpu.memory_space<vmem>>, %arg8: memref<8x64xbf16, #tpu.memory_space<vmem>>, %arg9: memref<1x1xf32, #tpu.memory_space<smem>>, %arg10: memref<1x8x256xf32, #tpu.memory_space<vmem>>) attributes {dimension_semantics = [#tpu.dimension_semantics<parallel>], iteration_bounds = array<i64: 2>, scalar_prefetch = 0 : i64, scratch_operands = 0 : i64, tpu.core_type = #tpu.core_type<tc>, window_params = [{transform_indices = @transform_0, window_bounds = array<i64: 256, 128>}, {pipeline_mode = #tpu.pipeline_mode<synchronous>, transform_indices = @transform_1, window_bounds = array<i64: 128, 256>}, {pipeline_mode = #tpu.pipeline_mode<synchronous>, transform_indices = @transform_2, window_bounds = array<i64: 2, 256>}, {pipeline_mode = #tpu.pipeline_mode<synchronous>, transform_indices = @transform_3, window_bounds = array<i64: 256, 128>}, {pipeline_mode = #tpu.pipeline_mode<synchronous>, transform_indices = @transform_4, window_bounds = array<i64: 2, 128>}, {pipeline_mode = #tpu.pipeline_mode<synchronous>, transform_indices = @transform_5, window_bounds = array<i64: 128, 64>}, {pipeline_mode = #tpu.pipeline_mode<synchronous>, transform_indices = @transform_6, window_bounds = array<i64: 2, 64>}, {pipeline_mode = #tpu.pipeline_mode<synchronous>, transform_indices = @transform_7, window_bounds = array<i64: 8, 64>}, {transform_indices = @transform_8, window_bounds = array<i64: 1, 1>}, {transform_indices = @transform_9, window_bounds = array<i64: 1, 8, 256>}]} {
    %c0 = arith.constant 0 : index
    %c0_0 = arith.constant 0 : index
    %0 = vector.load %arg1[%c0, %c0_0] : memref<256x128xf32, #tpu.memory_space<vmem>>, vector<256x128xf32>
    %1 = arith.truncf %0 : vector<256x128xf32> to vector<256x128xbf16>
    %c0_1 = arith.constant 0 : index
    %c0_2 = arith.constant 0 : index
    %2 = vector.load %arg2[%c0_1, %c0_2] : memref<128x256xbf16, #tpu.memory_space<vmem>>, vector<128x256xbf16>
    %cst = arith.constant dense<0.000000e+00> : vector<256x256xf32>
    %3 = tpu.matmul %1, %2, %cst {dimension_numbers = #tpu.dot_dimension_numbers<[1], [0], [0], [1], [0, 0, 1, 1], [], []>} : vector<256x128xbf16>, vector<128x256xbf16>, vector<256x256xf32> -> vector<256x256xf32>
    %c0_3 = arith.constant 0 : index
    %c0_4 = arith.constant 0 : index
    %4 = vector.load %arg3[%c0_3, %c0_4] : memref<2x256xf32, #tpu.memory_space<vmem>>, vector<1x256xf32>
    %5 = vector.broadcast %4 : vector<1x256xf32> to vector<256x256xf32>
    %6 = arith.mulf %3, %5 : vector<256x256xf32>
    %c1 = arith.constant 1 : index
    %c0_5 = arith.constant 0 : index
    %7 = vector.load %arg3[%c1, %c0_5] : memref<2x256xf32, #tpu.memory_space<vmem>>, vector<1x256xf32>
    %8 = vector.broadcast %7 : vector<1x256xf32> to vector<256x256xf32>
    %9 = arith.addf %6, %8 : vector<256x256xf32>
    %cst_6 = arith.constant 0.000000e+00 : f32
    %10 = vector.broadcast %cst_6 : f32 to vector<256x256xf32>
    %11 = arith.cmpf oge, %9, %10 : vector<256x256xf32>
    %cst_7 = arith.constant 0.00999999977 : f32
    %12 = vector.broadcast %cst_7 : f32 to vector<256x256xf32>
    %13 = arith.mulf %12, %9 : vector<256x256xf32>
    %14 = arith.select %11, %9, %13 : vector<256x256xi1>, vector<256x256xf32>
    %15 = arith.truncf %14 : vector<256x256xf32> to vector<256x256xbf16>
    %c0_8 = arith.constant 0 : index
    %c0_9 = arith.constant 0 : index
    %16 = vector.load %arg4[%c0_8, %c0_9] : memref<256x128xbf16, #tpu.memory_space<vmem>>, vector<256x128xbf16>
    %cst_10 = arith.constant dense<0.000000e+00> : vector<256x128xf32>
    %17 = tpu.matmul %15, %16, %cst_10 {dimension_numbers = #tpu.dot_dimension_numbers<[1], [0], [0], [1], [0, 0, 1, 1], [], []>} : vector<256x256xbf16>, vector<256x128xbf16>, vector<256x128xf32> -> vector<256x128xf32>
    %c0_11 = arith.constant 0 : index
    %c0_12 = arith.constant 0 : index
    %18 = vector.load %arg5[%c0_11, %c0_12] : memref<2x128xf32, #tpu.memory_space<vmem>>, vector<1x128xf32>
    %19 = vector.broadcast %18 : vector<1x128xf32> to vector<256x128xf32>
    %20 = arith.mulf %17, %19 : vector<256x128xf32>
    %c1_13 = arith.constant 1 : index
    %c0_14 = arith.constant 0 : index
    %21 = vector.load %arg5[%c1_13, %c0_14] : memref<2x128xf32, #tpu.memory_space<vmem>>, vector<1x128xf32>
    %22 = vector.broadcast %21 : vector<1x128xf32> to vector<256x128xf32>
    %23 = arith.addf %20, %22 : vector<256x128xf32>
    %cst_15 = arith.constant 0.000000e+00 : f32
    %24 = vector.broadcast %cst_15 : f32 to vector<256x128xf32>
    %25 = arith.cmpf oge, %23, %24 : vector<256x128xf32>
    %cst_16 = arith.constant 0.00999999977 : f32
    %26 = vector.broadcast %cst_16 : f32 to vector<256x128xf32>
    %27 = arith.mulf %26, %23 : vector<256x128xf32>
    %28 = arith.select %25, %23, %27 : vector<256x128xi1>, vector<256x128xf32>
    %29 = arith.truncf %28 : vector<256x128xf32> to vector<256x128xbf16>
    %c0_17 = arith.constant 0 : index
    %c0_18 = arith.constant 0 : index
    %30 = vector.load %arg6[%c0_17, %c0_18] : memref<128x64xbf16, #tpu.memory_space<vmem>>, vector<128x64xbf16>
    %cst_19 = arith.constant dense<0.000000e+00> : vector<256x64xf32>
    %31 = tpu.matmul %29, %30, %cst_19 {dimension_numbers = #tpu.dot_dimension_numbers<[1], [0], [0], [1], [0, 0, 1, 1], [], []>} : vector<256x128xbf16>, vector<128x64xbf16>, vector<256x64xf32> -> vector<256x64xf32>
    %c0_20 = arith.constant 0 : index
    %c0_21 = arith.constant 0 : index
    %32 = vector.load %arg7[%c0_20, %c0_21] : memref<2x64xf32, #tpu.memory_space<vmem>>, vector<1x64xf32>
    %33 = vector.broadcast %32 : vector<1x64xf32> to vector<256x64xf32>
    %34 = arith.mulf %31, %33 : vector<256x64xf32>
    %c1_22 = arith.constant 1 : index
    %c0_23 = arith.constant 0 : index
    %35 = vector.load %arg7[%c1_22, %c0_23] : memref<2x64xf32, #tpu.memory_space<vmem>>, vector<1x64xf32>
    %36 = vector.broadcast %35 : vector<1x64xf32> to vector<256x64xf32>
    %37 = arith.addf %34, %36 : vector<256x64xf32>
    %cst_24 = arith.constant 0.000000e+00 : f32
    %38 = vector.broadcast %cst_24 : f32 to vector<256x64xf32>
    %39 = arith.cmpf oge, %37, %38 : vector<256x64xf32>
    %cst_25 = arith.constant 0.00999999977 : f32
    %40 = vector.broadcast %cst_25 : f32 to vector<256x64xf32>
    %41 = arith.mulf %40, %37 : vector<256x64xf32>
    %42 = arith.select %39, %37, %41 : vector<256x64xi1>, vector<256x64xf32>
    %c0_26 = arith.constant 0 : index
    %c0_27 = arith.constant 0 : index
    %43 = vector.load %arg8[%c0_26, %c0_27] : memref<8x64xbf16, #tpu.memory_space<vmem>>, vector<8x64xbf16>
    %44 = arith.truncf %42 : vector<256x64xf32> to vector<256x64xbf16>
    %cst_28 = arith.constant dense<0.000000e+00> : vector<8x256xf32>
    %45 = tpu.matmul %43, %44, %cst_28 {dimension_numbers = #tpu.dot_dimension_numbers<[1], [1], [0], [0], [0, 0, 1, 0], [], []>} : vector<8x64xbf16>, vector<256x64xbf16>, vector<8x256xf32> -> vector<8x256xf32>
    %c0_29 = arith.constant 0 : index
    %c0_30 = arith.constant 0 : index
    %46 = memref.load %arg9[%c0_29, %c0_30] : memref<1x1xf32, #tpu.memory_space<smem>>
    %47 = vector.broadcast %46 : f32 to vector<8x256xf32>
    %48 = arith.addf %45, %47 : vector<8x256xf32>
    %c0_31 = arith.constant 0 : index
    %c0_32 = arith.constant 0 : index
    %c0_33 = arith.constant 0 : index
    %49 = vector.load %arg10[%c0_31, %c0_32, %c0_33] : memref<1x8x256xf32, #tpu.memory_space<vmem>>, vector<1x8x256xf32>
    %50 = vector.shape_cast %49 : vector<1x8x256xf32> to vector<8x256xf32>
    %51 = vector.shape_cast %48 : vector<8x256xf32> to vector<1x8x256xf32>
    tpu.vector_store %arg10[%c0_31, %c0_32, %c0_33], %51 {strides = array<i32>} : memref<1x8x256xf32, #tpu.memory_space<vmem>>, vector<1x8x256xf32>,
    return
  }
  func.func @transform_0(%arg0: i32) -> (i32, i32) {
    %c0_i32 = arith.constant 0 : i32
    %c0_i32_0 = arith.constant 0 : i32
    return %arg0, %c0_i32 : i32, i32
  }
  func.func @transform_1(%arg0: i32) -> (i32, i32) {
    %c0_i32 = arith.constant 0 : i32
    %c0_i32_0 = arith.constant 0 : i32
    %c0_i32_1 = arith.constant 0 : i32
    return %c0_i32, %c0_i32_0 : i32, i32
  }
  func.func @transform_2(%arg0: i32) -> (i32, i32) {
    %c0_i32 = arith.constant 0 : i32
    %c0_i32_0 = arith.constant 0 : i32
    %c0_i32_1 = arith.constant 0 : i32
    return %c0_i32, %c0_i32_0 : i32, i32
  }
  func.func @transform_3(%arg0: i32) -> (i32, i32) {
    %c0_i32 = arith.constant 0 : i32
    %c0_i32_0 = arith.constant 0 : i32
    %c0_i32_1 = arith.constant 0 : i32
    return %c0_i32, %c0_i32_0 : i32, i32
  }
  func.func @transform_4(%arg0: i32) -> (i32, i32) {
    %c0_i32 = arith.constant 0 : i32
    %c0_i32_0 = arith.constant 0 : i32
    %c0_i32_1 = arith.constant 0 : i32
    return %c0_i32, %c0_i32_0 : i32, i32
  }
  func.func @transform_5(%arg0: i32) -> (i32, i32) {
    %c0_i32 = arith.constant 0 : i32
    %c0_i32_0 = arith.constant 0 : i32
    %c0_i32_1 = arith.constant 0 : i32
    return %c0_i32, %c0_i32_0 : i32, i32
  }
  func.func @transform_6(%arg0: i32) -> (i32, i32) {
    %c0_i32 = arith.constant 0 : i32
    %c0_i32_0 = arith.constant 0 : i32
    %c0_i32_1 = arith.constant 0 : i32
    return %c0_i32, %c0_i32_0 : i32, i32
  }
  func.func @transform_7(%arg0: i32) -> (i32, i32) {
    %c0_i32 = arith.constant 0 : i32
    %c0_i32_0 = arith.constant 0 : i32
    %c0_i32_1 = arith.constant 0 : i32
    return %c0_i32, %c0_i32_0 : i32, i32
  }
  func.func @transform_8(%arg0: i32) -> (i32, i32) {
    %c0_i32 = arith.constant 0 : i32
    %c0_i32_0 = arith.constant 0 : i32
    %c0_i32_1 = arith.constant 0 : i32
    return %c0_i32, %c0_i32_0 : i32, i32
  }
  func.func @transform_9(%arg0: i32) -> (i32, i32, i32) {
    %c0_i32 = arith.constant 0 : i32
    %c0_i32_0 = arith.constant 0 : i32
    %c0_i32_1 = arith.constant 0 : i32
    return %arg0, %c0_i32, %c0_i32_0 : i32, i32, i32
  }
}

</mosaic_0001>

<llo_original>
// kernel: tpu_custom_call.1
$region0: #{tpu_custom_call.1}
  #allocation0 [shape = 'u32[]', space=smem, size = 0x4, offset = 0x4, fixed_abs, tag = 'smem constant byte address 0x4 - core index']
  #allocation1 [shape = 'u32[144,128]{1,0:T(1,128)}', space=vmem, size = 0x12000, scoped, tag = 'internal scratch']
  #allocation2 [shape = 'f32[1,1]{1,0:T(1,128)S(6)}', space=smem, size = 0x200, scoped, tag = 'scoped memory for tpu_custom_call.1']
  %s0 = inlined_call_operand.hbm [shape: f32[272,128], index: 0, kind: input, shape index: {}]
  %s1 = inlined_call_operand.hbm [shape: bf16[128,256], index: 1, kind: input, shape index: {}]
  %s2 = inlined_call_operand.vmem [shape: f32[2,256], index: 2, kind: input, shape index: {}]
  %s3 = inlined_call_operand.hbm [shape: bf16[256,128], index: 3, kind: input, shape index: {}]
  %s4 = inlined_call_operand.vmem [shape: f32[2,128], index: 4, kind: input, shape index: {}]
  %s5 = inlined_call_operand.vmem [shape: bf16[128,64], index: 5, kind: input, shape index: {}]
  %s6 = inlined_call_operand.vmem [shape: f32[2,64], index: 6, kind: input, shape index: {}]
  %s7 = inlined_call_operand.vmem [shape: bf16[8,64], index: 7, kind: input, shape index: {}]
  %s8 = inlined_call_operand.<no memory space> [shape: f32[1,1], index: 8, kind: input, shape index: {}]
  %s9 = inlined_call_operand.hbm [shape: f32[2,8,256], index: 9, kind: output, shape index: {}]
  %s10 = sld [smem:[#allocation0]]
  $region81: #{tpu_custom_call.1} parent=0
    _
  %s12 = ssub.s32 1, %s10
  %s13 = scalar_select 0, %s12, %s10
  %14 = sst [smem:[#allocation2]] %s8
  $region1: #{tpu_custom_call.1} parent=0
    #allocation3 [shape = 'u8[262144]{0}', space=vmem, size = 0x40000, scoped, tag = 'input window, operand 0']
    #allocation4 [shape = 's32[2]{0}', space=sflag, size = 0x8, scoped, tag = 'scoped memory for tpu_custom_call.1']
    #allocation5 [shape = 's32[2]{0}', space=sflag, size = 0x8, scoped, tag = 'scoped memory for tpu_custom_call.1']
    #allocation6 [shape = 'u8[65536]{0}', space=vmem, size = 0x10000, scoped, tag = 'input window, operand 1, single buffered']
    #allocation7 [shape = 's32[1]{0}', space=sflag, size = 0x4, scoped, tag = 'scoped memory for tpu_custom_call.1']
    #allocation8 [shape = 'u8[65536]{0}', space=vmem, size = 0x10000, scoped, tag = 'input window, operand 3, single buffered']
    #allocation9 [shape = 'u8[16384]{0}', space=vmem, size = 0x4000, scoped, tag = 'output window, operand 0']
    %15 = vsyncpa [#allocation4], 0
    %s16 = scalar_lea.sflag [#allocation4], 1
    %17 = vsyncpa %s16, 0
    %18 = vsyncpa [#allocation7], 0
    %19 = vsyncpa [#allocation5], 0
    %s20 = scalar_lea.sflag [#allocation5], 1
    %21 = vsyncpa %s20, 0
    loop: start=0, step=1, limit=4
    $region2: #{tpu_custom_call.1} parent=1 // loop_pre_header
      _
    $region3: #{tpu_custom_call.1} parent=1 // loop_header
      %s23 = sphi 0, %s27
      %p24 = scmp.ge.s32.totalorder %s23, 4
      %s33 = sphi 0, %s35
      %s36 = sphi 0, %s33
      %s37 = sphi 0, %s36
      %s53 = sphi 0, %s37
      %s57 = sphi 0, %s57
      %s59 = sphi 0, %s57
      %s60 = sphi 0, %s59
      %s74 = sphi 0, %s60
      %s78 = sphi 0, %s78
      %s80 = sphi 0, %s78
      %s81 = sphi 0, %s80
      %s95 = sphi 0, %s81
      %s99 = sphi 0, %s99
      %s101 = sphi 0, %s99
      %s102 = sphi 0, %s101
      %s116 = sphi 0, %s102
      %s120 = sphi 0, %s120
      %s122 = sphi 0, %s120
      %s123 = sphi 0, %s122
      %s137 = sphi 0, %s123
      %s141 = sphi 0, %s141
      %s143 = sphi 0, %s141
      %s144 = sphi 0, %s143
      %s158 = sphi 0, %s144
      %s162 = sphi 0, %s162
      %s164 = sphi 0, %s162
      %s165 = sphi 0, %s164
      %s179 = sphi 0, %s165
      %s183 = sphi 0, %s183
      %s185 = sphi 0, %s183
      %s186 = sphi 0, %s185
      %s200 = sphi 0, %s186
      %s204 = sphi 0, %s204
      %s206 = sphi 0, %s204
      %s207 = sphi 0, %s206
      %s221 = sphi 0, %s207
      %s227 = sphi 0, %s229
      %s230 = sphi 0, %s227
      %s231 = sphi 0, %s230
      %s247 = sphi 0, %s231
    $region4: #{tpu_custom_call.1} parent=1 // loop_header_branch
      %26 = sbr.rel (%p24) target = $region8
    $region5: #{tpu_custom_call.1} parent=1 // loop_body
      %s28 = ssub.s32 %s23, 1
      %s29 = ssub.s32 %s23, 2
      %s30 = sadd.s32 %s23, 1
      %s31 = ssub.s32 %s23, %s30
      %p32 = scmp.eq.s32.totalorder %s31, 0
      %s34 = sadd.s32 %s33, 1
      %s35 = scalar_select %p32, %s33, %s34
      %p38 = pneg %p32
      %p39 = scmp.eq.s32.totalorder %s23, 1
      %p40 = por %p38, %p39
      %p41 = scmp.ne.s32.totalorder %s33, %s36
      %p42 = scmp.eq.s32.totalorder %s23, 0
      %p43 = por %p41, %p42
      %p44 = scmp.ne.s32.totalorder %s33, %s36
      %p45 = scmp.eq.s32.totalorder %s28, 1
      %p46 = por %p44, %p45
      %p47 = scmp.ne.s32.totalorder %s36, %s37
      %p48 = scmp.eq.s32.totalorder %s28, 0
      %p49 = por %p47, %p48
      %p50 = scmp.ne.s32.totalorder %s36, %s37
      %p51 = scmp.eq.s32.totalorder %s29, 1
      %p52 = por %p50, %p51
      %p54 = scmp.ne.s32.totalorder %s37, %s53
      %p55 = scmp.eq.s32.totalorder %s29, 0
      %p56 = por %p54, %p55
      %s58 = sadd.s32 %s57, 1
      %p61 = scmp.eq.s32.totalorder %s23, 1
      %p62 = scmp.ne.s32.totalorder %s57, %s59
      %p63 = scmp.eq.s32.totalorder %s23, 0
      %p64 = por %p62, %p63
      %p65 = scmp.ne.s32.totalorder %s57, %s59
      %p66 = scmp.eq.s32.totalorder %s28, 1
      %p67 = por %p65, %p66
      %p68 = scmp.ne.s32.totalorder %s59, %s60
      %p69 = scmp.eq.s32.totalorder %s28, 0
      %p70 = por %p68, %p69
      %p71 = scmp.ne.s32.totalorder %s59, %s60
      %p72 = scmp.eq.s32.totalorder %s29, 1
      %p73 = por %p71, %p72
      %p75 = scmp.ne.s32.totalorder %s60, %s74
      %p76 = scmp.eq.s32.totalorder %s29, 0
      %p77 = por %p75, %p76
      %s79 = sadd.s32 %s78, 1
      %p82 = scmp.eq.s32.totalorder %s23, 1
      %p83 = scmp.ne.s32.totalorder %s78, %s80
      %p84 = scmp.eq.s32.totalorder %s23, 0
      %p85 = por %p83, %p84
      %p86 = scmp.ne.s32.totalorder %s78, %s80
      %p87 = scmp.eq.s32.totalorder %s28, 1
      %p88 = por %p86, %p87
      %p89 = scmp.ne.s32.totalorder %s80, %s81
      %p90 = scmp.eq.s32.totalorder %s28, 0
      %p91 = por %p89, %p90
      %p92 = scmp.ne.s32.totalorder %s80, %s81
      %p93 = scmp.eq.s32.totalorder %s29, 1
      %p94 = por %p92, %p93
      %p96 = scmp.ne.s32.totalorder %s81, %s95
      %p97 = scmp.eq.s32.totalorder %s29, 0
      %p98 = por %p96, %p97
      %s100 = sadd.s32 %s99, 1
      %p103 = scmp.eq.s32.totalorder %s23, 1
      %p104 = scmp.ne.s32.totalorder %s99, %s101
      %p105 = scmp.eq.s32.totalorder %s23, 0
      %p106 = por %p104, %p105
      %p107 = scmp.ne.s32.totalorder %s99, %s101
      %p108 = scmp.eq.s32.totalorder %s28, 1
      %p109 = por %p107, %p108
      %p110 = scmp.ne.s32.totalorder %s101, %s102
      %p111 = scmp.eq.s32.totalorder %s28, 0
      %p112 = por %p110, %p111
      %p113 = scmp.ne.s32.totalorder %s101, %s102
      %p114 = scmp.eq.s32.totalorder %s29, 1
      %p115 = por %p113, %p114
      %p117 = scmp.ne.s32.totalorder %s102, %s116
      %p118 = scmp.eq.s32.totalorder %s29, 0
      %p119 = por %p117, %p118
      %s121 = sadd.s32 %s120, 1
      %p124 = scmp.eq.s32.totalorder %s23, 1
      %p125 = scmp.ne.s32.totalorder %s120, %s122
      %p126 = scmp.eq.s32.totalorder %s23, 0
      %p127 = por %p125, %p126
      %p128 = scmp.ne.s32.totalorder %s120, %s122
      %p129 = scmp.eq.s32.totalorder %s28, 1
      %p130 = por %p128, %p129
      %p131 = scmp.ne.s32.totalorder %s122, %s123
      %p132 = scmp.eq.s32.totalorder %s28, 0
      %p133 = por %p131, %p132
      %p134 = scmp.ne.s32.totalorder %s122, %s123
      %p135 = scmp.eq.s32.totalorder %s29, 1
      %p136 = por %p134, %p135
      %p138 = scmp.ne.s32.totalorder %s123, %s137
      %p139 = scmp.eq.s32.totalorder %s29, 0
      %p140 = por %p138, %p139
      %s142 = sadd.s32 %s141, 1
      %p145 = scmp.eq.s32.totalorder %s23, 1
      %p146 = scmp.ne.s32.totalorder %s141, %s143
      %p147 = scmp.eq.s32.totalorder %s23, 0
      %p148 = por %p146, %p147
      %p149 = scmp.ne.s32.totalorder %s141, %s143
      %p150 = scmp.eq.s32.totalorder %s28, 1
      %p151 = por %p149, %p150
      %p152 = scmp.ne.s32.totalorder %s143, %s144
      %p153 = scmp.eq.s32.totalorder %s28, 0
      %p154 = por %p152, %p153
      %p155 = scmp.ne.s32.totalorder %s143, %s144
      %p156 = scmp.eq.s32.totalorder %s29, 1
      %p157 = por %p155, %p156
      %p159 = scmp.ne.s32.totalorder %s144, %s158
      %p160 = scmp.eq.s32.totalorder %s29, 0
      %p161 = por %p159, %p160
      %s163 = sadd.s32 %s162, 1
      %p166 = scmp.eq.s32.totalorder %s23, 1
      %p167 = scmp.ne.s32.totalorder %s162, %s164
      %p168 = scmp.eq.s32.totalorder %s23, 0
      %p169 = por %p167, %p168
      %p170 = scmp.ne.s32.totalorder %s162, %s164
      %p171 = scmp.eq.s32.totalorder %s28, 1
      %p172 = por %p170, %p171
      %p173 = scmp.ne.s32.totalorder %s164, %s165
      %p174 = scmp.eq.s32.totalorder %s28, 0
      %p175 = por %p173, %p174
      %p176 = scmp.ne.s32.totalorder %s164, %s165
      %p177 = scmp.eq.s32.totalorder %s29, 1
      %p178 = por %p176, %p177
      %p180 = scmp.ne.s32.totalorder %s165, %s179
      %p181 = scmp.eq.s32.totalorder %s29, 0
      %p182 = por %p180, %p181
      %s184 = sadd.s32 %s183, 1
      %p187 = scmp.eq.s32.totalorder %s23, 1
      %p188 = scmp.ne.s32.totalorder %s183, %s185
      %p189 = scmp.eq.s32.totalorder %s23, 0
      %p190 = por %p188, %p189
      %p191 = scmp.ne.s32.totalorder %s183, %s185
      %p192 = scmp.eq.s32.totalorder %s28, 1
      %p193 = por %p191, %p192
      %p194 = scmp.ne.s32.totalorder %s185, %s186
      %p195 = scmp.eq.s32.totalorder %s28, 0
      %p196 = por %p194, %p195
      %p197 = scmp.ne.s32.totalorder %s185, %s186
      %p198 = scmp.eq.s32.totalorder %s29, 1
      %p199 = por %p197, %p198
      %p201 = scmp.ne.s32.totalorder %s186, %s200
      %p202 = scmp.eq.s32.totalorder %s29, 0
      %p203 = por %p201, %p202
      %s205 = sadd.s32 %s204, 1
      %p208 = scmp.eq.s32.totalorder %s23, 1
      %p209 = scmp.ne.s32.totalorder %s204, %s206
      %p210 = scmp.eq.s32.totalorder %s23, 0
      %p211 = por %p209, %p210
      %p212 = scmp.ne.s32.totalorder %s204, %s206
      %p213 = scmp.eq.s32.totalorder %s28, 1
      %p214 = por %p212, %p213
      %p215 = scmp.ne.s32.totalorder %s206, %s207
      %p216 = scmp.eq.s32.totalorder %s28, 0
      %p217 = por %p215, %p216
      %p218 = scmp.ne.s32.totalorder %s206, %s207
      %p219 = scmp.eq.s32.totalorder %s29, 1
      %p220 = por %p218, %p219
      %p222 = scmp.ne.s32.totalorder %s207, %s221
      %p223 = scmp.eq.s32.totalorder %s29, 0
      %p224 = por %p222, %p223
      %s225 = ssub.s32 %s23, %s30
      %p226 = scmp.eq.s32.totalorder %s225, 0
      %s228 = sadd.s32 %s227, 1
      %s229 = scalar_select %p226, %s227, %s228
      %p232 = pneg %p226
      %p233 = scmp.eq.s32.totalorder %s23, 1
      %p234 = por %p232, %p233
      %p235 = scmp.ne.s32.totalorder %s227, %s230
      %p236 = scmp.eq.s32.totalorder %s23, 0
      %p237 = por %p235, %p236
      %p238 = scmp.ne.s32.totalorder %s227, %s230
      %p239 = scmp.eq.s32.totalorder %s28, 1
      %p240 = por %p238, %p239
      %p241 = scmp.ne.s32.totalorder %s230, %s231
      %p242 = scmp.eq.s32.totalorder %s28, 0
      %p243 = por %p241, %p242
      %p244 = scmp.ne.s32.totalorder %s230, %s231
      %p245 = scmp.eq.s32.totalorder %s29, 1
      %p246 = por %p244, %p245
      %p248 = scmp.ne.s32.totalorder %s231, %s247
      %p249 = scmp.eq.s32.totalorder %s29, 0
      %p250 = por %p248, %p249
      %p251 = scmp.le.s32.totalorder 1, %s23
      %p252 = scmp.lt.s32.totalorder %s23, 3
      %p253 = pnand %p251, %p252
      %p254 = pneg %p253
      // Predicated region
      $region9: #{tpu_custom_call.1} parent=5 // pred_check
        _
      $region10: #{tpu_custom_call.1} parent=5 // pred_check_branch
        %256 = sbr.rel (%p253) target = $region12
      $region11: #{tpu_custom_call.1} parent=5 // pred_region
        %s257 = ssub.s32 %s23, 1
        // Predicated region
        $region13: #{tpu_custom_call.1} parent=11 // pred_check
          %p258 = pneg %p70
        $region14: #{tpu_custom_call.1} parent=11 // pred_check_branch
          %260 = sbr.rel (%p258) target = $region16
        $region15: #{tpu_custom_call.1} parent=11 // pred_region
          %s262 = ssub.s32 2048, 2048
          %263 = vsyncadd [#allocation7], %s262
          %s264 = sshll.u32 [#allocation6], 4
          %s265 = int_to_ptr.vmem [resolvable:$true] %s264
          %270 = dma.hbm_to_vmem [thread:$0]  %s1, 2048, %s265, [#allocation7], 128, 128, 8
        $region16: #{tpu_custom_call.1} parent=11 // pred_fallthru
          _
        // Predicated region
        $region17: #{tpu_custom_call.1} parent=11 // pred_check
          %p271 = pneg %p91
        $region18: #{tpu_custom_call.1} parent=11 // pred_check_branch
          %273 = sbr.rel (%p271) target = $region20
        $region19: #{tpu_custom_call.1} parent=11 // pred_region
          _
        $region20: #{tpu_custom_call.1} parent=11 // pred_fallthru
          _
        // Predicated region
        $region21: #{tpu_custom_call.1} parent=11 // pred_check
          %p274 = pneg %p112
        $region22: #{tpu_custom_call.1} parent=11 // pred_check_branch
          %276 = sbr.rel (%p274) target = $region24
        $region23: #{tpu_custom_call.1} parent=11 // pred_region
          %s278 = ssub.s32 2048, 2048
          %279 = vsyncadd [#allocation7], %s278
          %s280 = sshll.u32 [#allocation8], 4
          %s281 = int_to_ptr.vmem [resolvable:$true] %s280
          %286 = dma.hbm_to_vmem [thread:$0]  %s3, 2048, %s281, [#allocation7], 64, 64, 4
        $region24: #{tpu_custom_call.1} parent=11 // pred_fallthru
          _
        // Predicated region
        $region25: #{tpu_custom_call.1} parent=11 // pred_check
          %p287 = pneg %p133
        $region26: #{tpu_custom_call.1} parent=11 // pred_check_branch
          %289 = sbr.rel (%p287) target = $region28
        $region27: #{tpu_custom_call.1} parent=11 // pred_region
          _
        $region28: #{tpu_custom_call.1} parent=11 // pred_fallthru
          _
        // Predicated region
        $region29: #{tpu_custom_call.1} parent=11 // pred_check
          %p290 = pneg %p154
        $region30: #{tpu_custom_call.1} parent=11 // pred_check_branch
          %292 = sbr.rel (%p290) target = $region32
        $region31: #{tpu_custom_call.1} parent=11 // pred_region
          _
        $region32: #{tpu_custom_call.1} parent=11 // pred_fallthru
          _
        // Predicated region
        $region33: #{tpu_custom_call.1} parent=11 // pred_check
          %p293 = pneg %p175
        $region34: #{tpu_custom_call.1} parent=11 // pred_check_branch
          %295 = sbr.rel (%p293) target = $region36
        $region35: #{tpu_custom_call.1} parent=11 // pred_region
          _
        $region36: #{tpu_custom_call.1} parent=11 // pred_fallthru
          _
        // Predicated region
        $region37: #{tpu_custom_call.1} parent=11 // pred_check
          %p296 = pneg %p196
        $region38: #{tpu_custom_call.1} parent=11 // pred_check_branch
          %298 = sbr.rel (%p296) target = $region40
        $region39: #{tpu_custom_call.1} parent=11 // pred_region
          _
        $region40: #{tpu_custom_call.1} parent=11 // pred_fallthru
          _
        // Predicated region
        $region41: #{tpu_custom_call.1} parent=11 // pred_check
          %p299 = pneg %p217
        $region42: #{tpu_custom_call.1} parent=11 // pred_check_branch
          %301 = sbr.rel (%p299) target = $region44
        $region43: #{tpu_custom_call.1} parent=11 // pred_region
          _
        $region44: #{tpu_custom_call.1} parent=11 // pred_fallthru
          _
      $region12: #{tpu_custom_call.1} parent=5 // pred_fallthru
        _
      %p302 = scmp.lt.s32.totalorder %s23, 2
      // Predicated region
      $region45: #{tpu_custom_call.1} parent=5 // pred_check
        %p303 = pneg %p302
      $region46: #{tpu_custom_call.1} parent=5 // pred_check_branch
        %305 = sbr.rel (%p303) target = $region48
      $region47: #{tpu_custom_call.1} parent=5 // pred_region
        // Predicated region
        $region49: #{tpu_custom_call.1} parent=47 // pred_check
          %p306 = pneg %p43
        $region50: #{tpu_custom_call.1} parent=47 // pred_check_branch
          %308 = sbr.rel (%p306) target = $region52
        $region51: #{tpu_custom_call.1} parent=47 // pred_region
          %s309 = sand.u32 %s33, 1
          %s310 = scalar_lea.sflag [#allocation4], %s309
          %s311 = sand.u32 %s33, 1
          %s312 = smul.addr %s311, 256
          %s313 = scalar_lea.vmem [#allocation3], %s312
          %s314 = smul.u32 32, %s23
          %s315 = ssub.s32 34, %s314
          %p316 = scmp.lt.s32.totalorder %s315, 32
          %s317 = scalar_select %p316, %s315, 32
          %s318 = smul.u32 128, %s317
          %s320 = ssub.s32 4096, %s318
          %321 = vsyncadd %s310, %s320
          %p322 = scmp.ne.s32.totalorder 0, %s318
          %s323 = smul.addr %s314, 128
          %s324 = scalar_lea.hbm %s0, %s323
          %s325 = smul.u32 8, %s317
          %s326 = sshll.u32 %s313, 4
          %s327 = int_to_ptr.vmem [resolvable:$true] %s326
          %s328 = sshll.u32 %s325, 4
          %332 = dma.hbm_to_vmem [thread:$0]  (%p322), %s324, %s328, %s327, %s310, 128, 128, 8
        $region52: #{tpu_custom_call.1} parent=47 // pred_fallthru
          _
      $region48: #{tpu_custom_call.1} parent=5 // pred_fallthru
        _
      %p333 = scmp.le.s32.totalorder 1, %s23
      %p334 = scmp.lt.s32.totalorder %s23, 3
      %p335 = pnand %p333, %p334
      %p336 = pneg %p335
      // Predicated region
      $region53: #{tpu_custom_call.1} parent=5 // pred_check
        _
      $region54: #{tpu_custom_call.1} parent=5 // pred_check_branch
        %338 = sbr.rel (%p335) target = $region56
      $region55: #{tpu_custom_call.1} parent=5 // pred_region
        %s339 = ssub.s32 %s23, 1
        %s340 = sand.u32 %s36, 1
        %s341 = scalar_lea.sflag [#allocation4], %s340
        %s342 = sand.u32 %s36, 1
        %s343 = smul.addr %s342, 256
        %s344 = scalar_lea.vmem [#allocation3], %s343
        // Predicated region
        $region57: #{tpu_custom_call.1} parent=55 // pred_check
          %p345 = pneg %p49
        $region58: #{tpu_custom_call.1} parent=55 // pred_check_branch
          %347 = sbr.rel (%p345) target = $region60
        $region59: #{tpu_custom_call.1} parent=55 // pred_region
          %348 = dma.done %s341, 4096
        $region60: #{tpu_custom_call.1} parent=55 // pred_fallthru
          _
        // Predicated region
        $region61: #{tpu_custom_call.1} parent=55 // pred_check
          %p349 = pneg %p70
        $region62: #{tpu_custom_call.1} parent=55 // pred_check_branch
          %351 = sbr.rel (%p349) target = $region64
        $region63: #{tpu_custom_call.1} parent=55 // pred_region
          %352 = dma.done [#allocation7], 2048
        $region64: #{tpu_custom_call.1} parent=55 // pred_fallthru
          _
        // Predicated region
        $region65: #{tpu_custom_call.1} parent=55 // pred_check
          %p353 = pneg %p112
        $region66: #{tpu_custom_call.1} parent=55 // pred_check_branch
          %355 = sbr.rel (%p353) target = $region68
        $region67: #{tpu_custom_call.1} parent=55 // pred_region
          %356 = dma.done [#allocation7], 2048
        $region68: #{tpu_custom_call.1} parent=55 // pred_fallthru
          _
        %s357 = sand.u32 %s36, 1
        %s358 = scalar_lea.sflag [#allocation4], %s357
        %s359 = sand.u32 %s36, 1
        %s360 = smul.addr %s359, 256
        %s361 = scalar_lea.vmem [#allocation3], %s360
        %p362 = pneg %p49
        %p363 = pneg %p46
        %p364 = pneg %p70
        %p365 = pneg %p67
        %p366 = pneg %p91
        %p367 = pneg %p88
        %p368 = pneg %p112
        %p369 = pneg %p109
        %p370 = pneg %p133
        %p371 = pneg %p130
        %p372 = pneg %p154
        %p373 = pneg %p151
        %p374 = pneg %p175
        %p375 = pneg %p172
        %p376 = pneg %p196
        %p377 = pneg %p193
        %p378 = pneg %p217
        %p379 = pneg %p214
        %p380 = pneg %p243
        %p381 = pneg %p240
        %s382 = sand.u32 %s230, 1
        %s383 = scalar_lea.sflag [#allocation5], %s382
        %s384 = sand.u32 %s230, 1
        %s385 = smul.addr %s384, 16
        %s386 = scalar_lea.vmem [#allocation9], %s385
        %s387 = smul.u32 32, %s28
        %s388 = ssub.s32 34, %s387
        %p389 = scmp.lt.s32.totalorder %s388, 32
        %s390 = scalar_select %p389, %s388, 32
        %s391 = smul.u32 128, %s390
        %v393 = vld [vmem:[%s344] sm:$0xff]
        %v394 = vld [vmem:[%s344 + $0x8] sm:$0xff]
        %v395 = vld [vmem:[%s344 + $0x10] sm:$0xff]
        %v396 = vld [vmem:[%s344 + $0x18] sm:$0xff]
        %v397 = vld [vmem:[%s344 + $0x20] sm:$0xff]
        %v398 = vld [vmem:[%s344 + $0x28] sm:$0xff]
        %v399 = vld [vmem:[%s344 + $0x30] sm:$0xff]
        %v400 = vld [vmem:[%s344 + $0x38] sm:$0xff]
        %v401 = vld [vmem:[%s344 + $0x40] sm:$0xff]
        %v402 = vld [vmem:[%s344 + $0x48] sm:$0xff]
        %v403 = vld [vmem:[%s344 + $0x50] sm:$0xff]
        %v404 = vld [vmem:[%s344 + $0x58] sm:$0xff]
        %v405 = vld [vmem:[%s344 + $0x60] sm:$0xff]
        %v406 = vld [vmem:[%s344 + $0x68] sm:$0xff]
        %v407 = vld [vmem:[%s344 + $0x70] sm:$0xff]
        %v408 = vld [vmem:[%s344 + $0x78] sm:$0xff]
        %v409 = vld [vmem:[%s344 + $0x80] sm:$0xff]
        %v410 = vld [vmem:[%s344 + $0x88] sm:$0xff]
        %v411 = vld [vmem:[%s344 + $0x90] sm:$0xff]
        %v412 = vld [vmem:[%s344 + $0x98] sm:$0xff]
        %v413 = vld [vmem:[%s344 + $0xa0] sm:$0xff]
        %v414 = vld [vmem:[%s344 + $0xa8] sm:$0xff]
        %v415 = vld [vmem:[%s344 + $0xb0] sm:$0xff]
        %v416 = vld [vmem:[%s344 + $0xb8] sm:$0xff]
        %v417 = vld [vmem:[%s344 + $0xc0] sm:$0xff]
        %v418 = vld [vmem:[%s344 + $0xc8] sm:$0xff]
        %v419 = vld [vmem:[%s344 + $0xd0] sm:$0xff]
        %v420 = vld [vmem:[%s344 + $0xd8] sm:$0xff]
        %v421 = vld [vmem:[%s344 + $0xe0] sm:$0xff]
        %v422 = vld [vmem:[%s344 + $0xe8] sm:$0xff]
        %v423 = vld [vmem:[%s344 + $0xf0] sm:$0xff]
        %v424 = vld [vmem:[%s344 + $0xf8] sm:$0xff]
        %v425 = vpack.c.bf16 %v394, %v393
        %v426 = vpack.c.bf16 %v396, %v395
        %v427 = vpack.c.bf16 %v398, %v397
        %v428 = vpack.c.bf16 %v400, %v399
        %v429 = vpack.c.bf16 %v402, %v401
        %v430 = vpack.c.bf16 %v404, %v403
        %v431 = vpack.c.bf16 %v406, %v405
        %v432 = vpack.c.bf16 %v408, %v407
        %v433 = vpack.c.bf16 %v410, %v409
        %v434 = vpack.c.bf16 %v412, %v411
        %v435 = vpack.c.bf16 %v414, %v413
        %v436 = vpack.c.bf16 %v416, %v415
        %v437 = vpack.c.bf16 %v418, %v417
        %v438 = vpack.c.bf16 %v420, %v419
        %v439 = vpack.c.bf16 %v422, %v421
        %v440 = vpack.c.bf16 %v424, %v423
        %v441 = vld [vmem:[#allocation6] sm:$0xff]
        %v442 = vld [vmem:[#allocation6 + $0x8] sm:$0xff]
        %v443 = vld [vmem:[#allocation6 + $0x10] sm:$0xff]
        %v444 = vld [vmem:[#allocation6 + $0x18] sm:$0xff]
        %v445 = vld [vmem:[#allocation6 + $0x20] sm:$0xff]
        %v446 = vld [vmem:[#allocation6 + $0x28] sm:$0xff]
        %v447 = vld [vmem:[#allocation6 + $0x30] sm:$0xff]
        %v448 = vld [vmem:[#allocation6 + $0x38] sm:$0xff]
        %v449 = vld [vmem:[#allocation6 + $0x40] sm:$0xff]
        %v450 = vld [vmem:[#allocation6 + $0x48] sm:$0xff]
        %v451 = vld [vmem:[#allocation6 + $0x50] sm:$0xff]
        %v452 = vld [vmem:[#allocation6 + $0x58] sm:$0xff]
        %v453 = vld [vmem:[#allocation6 + $0x60] sm:$0xff]
        %v454 = vld [vmem:[#allocation6 + $0x68] sm:$0xff]
        %v455 = vld [vmem:[#allocation6 + $0x70] sm:$0xff]
        %v456 = vld [vmem:[#allocation6 + $0x78] sm:$0xff]
        %v473 = vunpack.c.l.b16 %v441
        %v474 = vunpack.c.h.b16 %v441
        %v475 = vunpack.c.l.b16 %v442
        %v476 = vunpack.c.h.b16 %v442
        %v477 = vunpack.c.l.b16 %v443
        %v478 = vunpack.c.h.b16 %v443
        %v479 = vunpack.c.l.b16 %v444
        %v480 = vunpack.c.h.b16 %v444
        %v481 = vunpack.c.l.b16 %v445
        %v482 = vunpack.c.h.b16 %v445
        %v483 = vunpack.c.l.b16 %v446
        %v484 = vunpack.c.h.b16 %v446
        %v485 = vunpack.c.l.b16 %v447
        %v486 = vunpack.c.h.b16 %v447
        %v487 = vunpack.c.l.b16 %v448
        %v488 = vunpack.c.h.b16 %v448
        %v489 = vunpack.c.l.b16 %v449
        %v490 = vunpack.c.h.b16 %v449
        %v491 = vunpack.c.l.b16 %v450
        %v492 = vunpack.c.h.b16 %v450
        %v493 = vunpack.c.l.b16 %v451
        %v494 = vunpack.c.h.b16 %v451
        %v495 = vunpack.c.l.b16 %v452
        %v496 = vunpack.c.h.b16 %v452
        %v497 = vunpack.c.l.b16 %v453
        %v498 = vunpack.c.h.b16 %v453
        %v499 = vunpack.c.l.b16 %v454
        %v500 = vunpack.c.h.b16 %v454
        %v501 = vunpack.c.l.b16 %v455
        %v502 = vunpack.c.h.b16 %v455
        %v503 = vunpack.c.l.b16 %v456
        %v504 = vunpack.c.h.b16 %v456
        %v505 = vpack.c.b16 %v475, %v473
        %v506 = vpack.c.b16 %v476, %v474
        %v507 = vpack.c.b16 %v479, %v477
        %v508 = vpack.c.b16 %v480, %v478
        %v509 = vpack.c.b16 %v483, %v481
        %v510 = vpack.c.b16 %v484, %v482
        %v511 = vpack.c.b16 %v487, %v485
        %v512 = vpack.c.b16 %v488, %v486
        %v513 = vpack.c.b16 %v491, %v489
        %v514 = vpack.c.b16 %v492, %v490
        %v515 = vpack.c.b16 %v495, %v493
        %v516 = vpack.c.b16 %v496, %v494
        %v517 = vpack.c.b16 %v499, %v497
        %v518 = vpack.c.b16 %v500, %v498
        %v519 = vpack.c.b16 %v503, %v501
        %v520 = vpack.c.b16 %v504, %v502
        %537 = vmatprep.subr.bf16.mxu0 %v506
        %538 = vmatpush1.bf16.msra.mxu0 %v505
        %539 = vmatprep.subr.bf16.mxu0 %v508
        %540 = vmatpush1.bf16.msra.mxu0 %v507
        %541 = vmatprep.subr.bf16.mxu0 %v510
        %542 = vmatpush1.bf16.msra.mxu0 %v509
        %543 = vmatprep.subr.bf16.mxu0 %v512
        %544 = vmatpush1.bf16.msra.mxu0 %v511
        %545 = vmatprep.subr.bf16.mxu0 %v514
        %546 = vmatpush1.bf16.msra.mxu0 %v513
        %547 = vmatprep.subr.bf16.mxu0 %v516
        %548 = vmatpush1.bf16.msra.mxu0 %v515
        %549 = vmatprep.subr.bf16.mxu0 %v518
        %550 = vmatpush1.bf16.msra.mxu0 %v517
        %551 = vmatprep.subr.bf16.mxu0 %v520
        %552 = vmatpush1.bf16.msra.mxu0 %v519
        %553 = vmatprep.subr.bf16.mxu0 0
        %554 = vmatpush1.bf16.msra.mxu0 0
        %555 = vmatprep.subr.bf16.mxu0 0
        %556 = vmatpush1.bf16.msra.mxu0 0
        %557 = vmatprep.subr.bf16.mxu0 0
        %558 = vmatpush1.bf16.msra.mxu0 0
        %559 = vmatprep.subr.bf16.mxu0 0
        %560 = vmatpush1.bf16.msra.mxu0 0
        %561 = vmatprep.subr.bf16.mxu0 0
        %562 = vmatpush1.bf16.msra.mxu0 0
        %563 = vmatprep.subr.bf16.mxu0 0
        %564 = vmatpush1.bf16.msra.mxu0 0
        %565 = vmatprep.subr.bf16.mxu0 0
        %566 = vmatpush1.bf16.msra.mxu0 0
        %567 = vmatprep.subr.bf16.mxu0 0
        %568 = vmatpush1.bf16.msra.mxu0 0
        %569 = vmatprep.mubr.bf16.mxu0 0
        %570 = vmatmul.mubr.bf16.gmra.mrb[0].mxu0 %v425
        %v571 = vpop.f32.mrb[0].mxu0
        %v572 = vadd.f32 0.0, %v571
        %v573 = vpop.f32.mrb[0].mxu0
        %v574 = vadd.f32 0.0, %v573
        %v575 = vpop.f32.mrb[0].mxu0
        %v576 = vadd.f32 0.0, %v575
        %v577 = vpop.f32.mrb[0].mxu0
        %v578 = vadd.f32 0.0, %v577
        %579 = vmatprep.mubr.bf16.mxu0 0
        %580 = vmatmul.mubr.bf16.gmra.mrb[0].mxu0 %v426
        %v581 = vpop.f32.mrb[0].mxu0
        %v582 = vadd.f32 0.0, %v581
        %v583 = vpop.f32.mrb[0].mxu0
        %v584 = vadd.f32 0.0, %v583
        %v585 = vpop.f32.mrb[0].mxu0
        %v586 = vadd.f32 0.0, %v585
        %v587 = vpop.f32.mrb[0].mxu0
        %v588 = vadd.f32 0.0, %v587
        %589 = vmatprep.mubr.bf16.mxu0 0
        %590 = vmatmul.mubr.bf16.gmra.mrb[0].mxu0 %v427
        %v591 = vpop.f32.mrb[0].mxu0
        %v592 = vadd.f32 0.0, %v591
        %v593 = vpop.f32.mrb[0].mxu0
        %v594 = vadd.f32 0.0, %v593
        %v595 = vpop.f32.mrb[0].mxu0
        %v596 = vadd.f32 0.0, %v595
        %v597 = vpop.f32.mrb[0].mxu0
        %v598 = vadd.f32 0.0, %v597
        %599 = vmatprep.mubr.bf16.mxu0 0
        %600 = vmatmul.mubr.bf16.gmra.mrb[0].mxu0 %v428
        %v601 = vpop.f32.mrb[0].mxu0
        %v602 = vadd.f32 0.0, %v601
        %v603 = vpop.f32.mrb[0].mxu0
        %v604 = vadd.f32 0.0, %v603
        %v605 = vpop.f32.mrb[0].mxu0
        %v606 = vadd.f32 0.0, %v605
        %v607 = vpop.f32.mrb[0].mxu0
        %v608 = vadd.f32 0.0, %v607
        %609 = vmatprep.mubr.bf16.mxu0 0
        %610 = vmatmul.mubr.bf16.gmra.mrb[0].mxu0 %v429
        %v611 = vpop.f32.mrb[0].mxu0
        %v612 = vadd.f32 0.0, %v611
        %v613 = vpop.f32.mrb[0].mxu0
        %v614 = vadd.f32 0.0, %v613
        %v615 = vpop.f32.mrb[0].mxu0
        %v616 = vadd.f32 0.0, %v615
        %v617 = vpop.f32.mrb[0].mxu0
        %v618 = vadd.f32 0.0, %v617
        %619 = vmatprep.mubr.bf16.mxu0 0
        %620 = vmatmul.mubr.bf16.gmra.mrb[0].mxu0 %v430
        %v621 = vpop.f32.mrb[0].mxu0
        %v622 = vadd.f32 0.0, %v621
        %v623 = vpop.f32.mrb[0].mxu0
        %v624 = vadd.f32 0.0, %v623
        %v625 = vpop.f32.mrb[0].mxu0
        %v626 = vadd.f32 0.0, %v625
        %v627 = vpop.f32.mrb[0].mxu0
        %v628 = vadd.f32 0.0, %v627
        %629 = vmatprep.mubr.bf16.mxu0 0
        %630 = vmatmul.mubr.bf16.gmra.mrb[0].mxu0 %v431
        %v631 = vpop.f32.mrb[0].mxu0
        %v632 = vadd.f32 0.0, %v631
        %v633 = vpop.f32.mrb[0].mxu0
        %v634 = vadd.f32 0.0, %v633
        %v635 = vpop.f32.mrb[0].mxu0
        %v636 = vadd.f32 0.0, %v635
        %v637 = vpop.f32.mrb[0].mxu0
        %v638 = vadd.f32 0.0, %v637
        %639 = vmatprep.mubr.bf16.mxu0 0
        %640 = vmatmul.mubr.bf16.gmra.mrb[0].mxu0 %v432
        %v641 = vpop.f32.mrb[0].mxu0
        %v642 = vadd.f32 0.0, %v641
        %v643 = vpop.f32.mrb[0].mxu0
        %v644 = vadd.f32 0.0, %v643
        %v645 = vpop.f32.mrb[0].mxu0
        %v646 = vadd.f32 0.0, %v645
        %v647 = vpop.f32.mrb[0].mxu0
        %v648 = vadd.f32 0.0, %v647
        %649 = vmatprep.mubr.bf16.mxu0 0
        %650 = vmatmul.mubr.bf16.gmra.mrb[0].mxu0 %v433
        %v651 = vpop.f32.mrb[0].mxu0
        %v652 = vadd.f32 0.0, %v651
        %v653 = vpop.f32.mrb[0].mxu0
        %v654 = vadd.f32 0.0, %v653
        %v655 = vpop.f32.mrb[0].mxu0
        %v656 = vadd.f32 0.0, %v655
        %v657 = vpop.f32.mrb[0].mxu0
        %v658 = vadd.f32 0.0, %v657
        %659 = vmatprep.mubr.bf16.mxu0 0
        %660 = vmatmul.mubr.bf16.gmra.mrb[0].mxu0 %v434
        %v661 = vpop.f32.mrb[0].mxu0
        %v662 = vadd.f32 0.0, %v661
        %v663 = vpop.f32.mrb[0].mxu0
        %v664 = vadd.f32 0.0, %v663
        %v665 = vpop.f32.mrb[0].mxu0
        %v666 = vadd.f32 0.0, %v665
        %v667 = vpop.f32.mrb[0].mxu0
        %v668 = vadd.f32 0.0, %v667
        %669 = vmatprep.mubr.bf16.mxu0 0
        %670 = vmatmul.mubr.bf16.gmra.mrb[0].mxu0 %v435
        %v671 = vpop.f32.mrb[0].mxu0
        %v672 = vadd.f32 0.0, %v671
        %v673 = vpop.f32.mrb[0].mxu0
        %v674 = vadd.f32 0.0, %v673
        %v675 = vpop.f32.mrb[0].mxu0
        %v676 = vadd.f32 0.0, %v675
        %v677 = vpop.f32.mrb[0].mxu0
        %v678 = vadd.f32 0.0, %v677
        %679 = vmatprep.mubr.bf16.mxu0 0
        %680 = vmatmul.mubr.bf16.gmra.mrb[0].mxu0 %v436
        %v681 = vpop.f32.mrb[0].mxu0
        %v682 = vadd.f32 0.0, %v681
        %v683 = vpop.f32.mrb[0].mxu0
        %v684 = vadd.f32 0.0, %v683
        %v685 = vpop.f32.mrb[0].mxu0
        %v686 = vadd.f32 0.0, %v685
        %v687 = vpop.f32.mrb[0].mxu0
        %v688 = vadd.f32 0.0, %v687
        %689 = vmatprep.mubr.bf16.mxu0 0
        %690 = vmatmul.mubr.bf16.gmra.mrb[0].mxu0 %v437
        %v691 = vpop.f32.mrb[0].mxu0
        %v692 = vadd.f32 0.0, %v691
        %v693 = vpop.f32.mrb[0].mxu0
        %v694 = vadd.f32 0.0, %v693
        %v695 = vpop.f32.mrb[0].mxu0
        %v696 = vadd.f32 0.0, %v695
        %v697 = vpop.f32.mrb[0].mxu0
        %v698 = vadd.f32 0.0, %v697
        %699 = vmatprep.mubr.bf16.mxu0 0
        %700 = vmatmul.mubr.bf16.gmra.mrb[0].mxu0 %v438
        %v701 = vpop.f32.mrb[0].mxu0
        %v702 = vadd.f32 0.0, %v701
        %v703 = vpop.f32.mrb[0].mxu0
        %v704 = vadd.f32 0.0, %v703
        %v705 = vpop.f32.mrb[0].mxu0
        %v706 = vadd.f32 0.0, %v705
        %v707 = vpop.f32.mrb[0].mxu0
        %v708 = vadd.f32 0.0, %v707
        %709 = vmatprep.mubr.bf16.mxu0 0
        %710 = vmatmul.mubr.bf16.gmra.mrb[0].mxu0 %v439
        %v711 = vpop.f32.mrb[0].mxu0
        %v712 = vadd.f32 0.0, %v711
        %v713 = vpop.f32.mrb[0].mxu0
        %v714 = vadd.f32 0.0, %v713
        %v715 = vpop.f32.mrb[0].mxu0
        %v716 = vadd.f32 0.0, %v715
        %v717 = vpop.f32.mrb[0].mxu0
        %v718 = vadd.f32 0.0, %v717
        %719 = vmatprep.mubr.bf16.mxu0 0
        %720 = vmatmul.mubr.bf16.gmra.mrb[0].mxu0 %v440
        %v721 = vpop.f32.mrb[0].mxu0
        %v722 = vadd.f32 0.0, %v721
        %v723 = vpop.f32.mrb[0].mxu0
        %v724 = vadd.f32 0.0, %v723
        %v725 = vpop.f32.mrb[0].mxu0
        %v726 = vadd.f32 0.0, %v725
        %v727 = vpop.f32.mrb[0].mxu0
        %v728 = vadd.f32 0.0, %v727
        %729 = vdwg.mxu0
        %v730 = vld [vmem:[%s2] ss:$2 sm:$0x3]
        %v732 = vlaneseq
        %v733 = vshrl.u32 %v732, 7
        %v734 = vsub.s32 0, %v733
        %v735 = vrot.slane %v730, %v734
        %v736 = vlaneseq
        %v737 = vshrl.u32 %v736, 7
        %v738 = vsub.s32 1, %v737
        %v739 = vrot.slane %v730, %v738
        %v742 = vmul.f32 %v572, %v735
        %v743 = vmul.f32 %v574, %v739
        %v744 = vmul.f32 %v576, %v735
        %v745 = vmul.f32 %v578, %v739
        %v746 = vmul.f32 %v582, %v735
        %v747 = vmul.f32 %v584, %v739
        %v748 = vmul.f32 %v586, %v735
        %v749 = vmul.f32 %v588, %v739
        %v750 = vmul.f32 %v592, %v735
        %v751 = vmul.f32 %v594, %v739
        %v752 = vmul.f32 %v596, %v735
        %v753 = vmul.f32 %v598, %v739
        %v754 = vmul.f32 %v602, %v735
        %v755 = vmul.f32 %v604, %v739
        %v756 = vmul.f32 %v606, %v735
        %v757 = vmul.f32 %v608, %v739
        %v758 = vmul.f32 %v612, %v735
        %v759 = vmul.f32 %v614, %v739
        %v760 = vmul.f32 %v616, %v735
        %v761 = vmul.f32 %v618, %v739
        %v762 = vmul.f32 %v622, %v735
        %v763 = vmul.f32 %v624, %v739
        %v764 = vmul.f32 %v626, %v735
        %v765 = vmul.f32 %v628, %v739
        %v766 = vmul.f32 %v632, %v735
        %v767 = vmul.f32 %v634, %v739
        %v768 = vmul.f32 %v636, %v735
        %v769 = vmul.f32 %v638, %v739
        %v770 = vmul.f32 %v642, %v735
        %v771 = vmul.f32 %v644, %v739
        %v772 = vmul.f32 %v646, %v735
        %v773 = vmul.f32 %v648, %v739
        %v774 = vmul.f32 %v652, %v735
        %v775 = vmul.f32 %v654, %v739
        %v776 = vmul.f32 %v656, %v735
        %v777 = vmul.f32 %v658, %v739
        %v778 = vmul.f32 %v662, %v735
        %v779 = vmul.f32 %v664, %v739
        %v780 = vmul.f32 %v666, %v735
        %v781 = vmul.f32 %v668, %v739
        %v782 = vmul.f32 %v672, %v735
        %v783 = vmul.f32 %v674, %v739
        %v784 = vmul.f32 %v676, %v735
        %v785 = vmul.f32 %v678, %v739
        %v786 = vmul.f32 %v682, %v735
        %v787 = vmul.f32 %v684, %v739
        %v788 = vmul.f32 %v686, %v735
        %v789 = vmul.f32 %v688, %v739
        %v790 = vmul.f32 %v692, %v735
        %v791 = vmul.f32 %v694, %v739
        %v792 = vmul.f32 %v696, %v735
        %v793 = vmul.f32 %v698, %v739
        %v794 = vmul.f32 %v702, %v735
        %v795 = vmul.f32 %v704, %v739
        %v796 = vmul.f32 %v706, %v735
        %v797 = vmul.f32 %v708, %v739
        %v798 = vmul.f32 %v712, %v735
        %v799 = vmul.f32 %v714, %v739
        %v800 = vmul.f32 %v716, %v735
        %v801 = vmul.f32 %v718, %v739
        %v802 = vmul.f32 %v722, %v735
        %v803 = vmul.f32 %v724, %v739
        %v804 = vmul.f32 %v726, %v735
        %v805 = vmul.f32 %v728, %v739
        %s806 = scalar_lea.vmem %s2, 1
        %v807 = vld [vmem:[%s806] ss:$2 sm:$0x3]
        %v809 = vlaneseq
        %v810 = vshrl.u32 %v809, 7
        %v811 = vsub.s32 0, %v810
        %v812 = vrot.slane %v807, %v811
        %v813 = vlaneseq
        %v814 = vshrl.u32 %v813, 7
        %v815 = vsub.s32 1, %v814
        %v816 = vrot.slane %v807, %v815
        %v819 = vadd.f32 %v742, %v812
        %v820 = vadd.f32 %v743, %v816
        %v821 = vadd.f32 %v744, %v812
        %v822 = vadd.f32 %v745, %v816
        %v823 = vadd.f32 %v746, %v812
        %v824 = vadd.f32 %v747, %v816
        %v825 = vadd.f32 %v748, %v812
        %v826 = vadd.f32 %v749, %v816
        %v827 = vadd.f32 %v750, %v812
        %v828 = vadd.f32 %v751, %v816
        %v829 = vadd.f32 %v752, %v812
        %v830 = vadd.f32 %v753, %v816
        %v831 = vadd.f32 %v754, %v812
        %v832 = vadd.f32 %v755, %v816
        %v833 = vadd.f32 %v756, %v812
        %v834 = vadd.f32 %v757, %v816
        %v835 = vadd.f32 %v758, %v812
        %v836 = vadd.f32 %v759, %v816
        %v837 = vadd.f32 %v760, %v812
        %v838 = vadd.f32 %v761, %v816
        %v839 = vadd.f32 %v762, %v812
        %v840 = vadd.f32 %v763, %v816
        %v841 = vadd.f32 %v764, %v812
        %v842 = vadd.f32 %v765, %v816
        %v843 = vadd.f32 %v766, %v812
        %v844 = vadd.f32 %v767, %v816
        %v845 = vadd.f32 %v768, %v812
        %v846 = vadd.f32 %v769, %v816
        %v847 = vadd.f32 %v770, %v812
        %v848 = vadd.f32 %v771, %v816
        %v849 = vadd.f32 %v772, %v812
        %v850 = vadd.f32 %v773, %v816
        %v851 = vadd.f32 %v774, %v812
        %v852 = vadd.f32 %v775, %v816
        %v853 = vadd.f32 %v776, %v812
        %v854 = vadd.f32 %v777, %v816
        %v855 = vadd.f32 %v778, %v812
        %v856 = vadd.f32 %v779, %v816
        %v857 = vadd.f32 %v780, %v812
        %v858 = vadd.f32 %v781, %v816
        %v859 = vadd.f32 %v782, %v812
        %v860 = vadd.f32 %v783, %v816
        %v861 = vadd.f32 %v784, %v812
        %v862 = vadd.f32 %v785, %v816
        %v863 = vadd.f32 %v786, %v812
        %v864 = vadd.f32 %v787, %v816
        %v865 = vadd.f32 %v788, %v812
        %v866 = vadd.f32 %v789, %v816
        %v867 = vadd.f32 %v790, %v812
        %v868 = vadd.f32 %v791, %v816
        %v869 = vadd.f32 %v792, %v812
        %v870 = vadd.f32 %v793, %v816
        %v871 = vadd.f32 %v794, %v812
        %v872 = vadd.f32 %v795, %v816
        %v873 = vadd.f32 %v796, %v812
        %v874 = vadd.f32 %v797, %v816
        %v875 = vadd.f32 %v798, %v812
        %v876 = vadd.f32 %v799, %v816
        %v877 = vadd.f32 %v800, %v812
        %v878 = vadd.f32 %v801, %v816
        %v879 = vadd.f32 %v802, %v812
        %v880 = vadd.f32 %v803, %v816
        %v881 = vadd.f32 %v804, %v812
        %v882 = vadd.f32 %v805, %v816
        %vm883 = vcmp.ge.f32.partialorder %v819, 0.0
        %vm884 = vcmp.ge.f32.partialorder %v820, 0.0
        %vm885 = vcmp.ge.f32.partialorder %v821, 0.0
        %vm886 = vcmp.ge.f32.partialorder %v822, 0.0
        %vm887 = vcmp.ge.f32.partialorder %v823, 0.0
        %vm888 = vcmp.ge.f32.partialorder %v824, 0.0
        %vm889 = vcmp.ge.f32.partialorder %v825, 0.0
        %vm890 = vcmp.ge.f32.partialorder %v826, 0.0
        %vm891 = vcmp.ge.f32.partialorder %v827, 0.0
        %vm892 = vcmp.ge.f32.partialorder %v828, 0.0
        %vm893 = vcmp.ge.f32.partialorder %v829, 0.0
        %vm894 = vcmp.ge.f32.partialorder %v830, 0.0
        %vm895 = vcmp.ge.f32.partialorder %v831, 0.0
        %vm896 = vcmp.ge.f32.partialorder %v832, 0.0
        %vm897 = vcmp.ge.f32.partialorder %v833, 0.0
        %vm898 = vcmp.ge.f32.partialorder %v834, 0.0
        %vm899 = vcmp.ge.f32.partialorder %v835, 0.0
        %vm900 = vcmp.ge.f32.partialorder %v836, 0.0
        %vm901 = vcmp.ge.f32.partialorder %v837, 0.0
        %vm902 = vcmp.ge.f32.partialorder %v838, 0.0
        %vm903 = vcmp.ge.f32.partialorder %v839, 0.0
        %vm904 = vcmp.ge.f32.partialorder %v840, 0.0
        %vm905 = vcmp.ge.f32.partialorder %v841, 0.0
        %vm906 = vcmp.ge.f32.partialorder %v842, 0.0
        %vm907 = vcmp.ge.f32.partialorder %v843, 0.0
        %vm908 = vcmp.ge.f32.partialorder %v844, 0.0
        %vm909 = vcmp.ge.f32.partialorder %v845, 0.0
        %vm910 = vcmp.ge.f32.partialorder %v846, 0.0
        %vm911 = vcmp.ge.f32.partialorder %v847, 0.0
        %vm912 = vcmp.ge.f32.partialorder %v848, 0.0
        %vm913 = vcmp.ge.f32.partialorder %v849, 0.0
        %vm914 = vcmp.ge.f32.partialorder %v850, 0.0
        %vm915 = vcmp.ge.f32.partialorder %v851, 0.0
        %vm916 = vcmp.ge.f32.partialorder %v852, 0.0
        %vm917 = vcmp.ge.f32.partialorder %v853, 0.0
        %vm918 = vcmp.ge.f32.partialorder %v854, 0.0
        %vm919 = vcmp.ge.f32.partialorder %v855, 0.0
        %vm920 = vcmp.ge.f32.partialorder %v856, 0.0
        %vm921 = vcmp.ge.f32.partialorder %v857, 0.0
        %vm922 = vcmp.ge.f32.partialorder %v858, 0.0
        %vm923 = vcmp.ge.f32.partialorder %v859, 0.0
        %vm924 = vcmp.ge.f32.partialorder %v860, 0.0
        %vm925 = vcmp.ge.f32.partialorder %v861, 0.0
        %vm926 = vcmp.ge.f32.partialorder %v862, 0.0
        %vm927 = vcmp.ge.f32.partialorder %v863, 0.0
        %vm928 = vcmp.ge.f32.partialorder %v864, 0.0
        %vm929 = vcmp.ge.f32.partialorder %v865, 0.0
        %vm930 = vcmp.ge.f32.partialorder %v866, 0.0
        %vm931 = vcmp.ge.f32.partialorder %v867, 0.0
        %vm932 = vcmp.ge.f32.partialorder %v868, 0.0
        %vm933 = vcmp.ge.f32.partialorder %v869, 0.0
        %vm934 = vcmp.ge.f32.partialorder %v870, 0.0
        %vm935 = vcmp.ge.f32.partialorder %v871, 0.0
        %vm936 = vcmp.ge.f32.partialorder %v872, 0.0
        %vm937 = vcmp.ge.f32.partialorder %v873, 0.0
        %vm938 = vcmp.ge.f32.partialorder %v874, 0.0
        %vm939 = vcmp.ge.f32.partialorder %v875, 0.0
        %vm940 = vcmp.ge.f32.partialorder %v876, 0.0
        %vm941 = vcmp.ge.f32.partialorder %v877, 0.0
        %vm942 = vcmp.ge.f32.partialorder %v878, 0.0
        %vm943 = vcmp.ge.f32.partialorder %v879, 0.0
        %vm944 = vcmp.ge.f32.partialorder %v880, 0.0
        %vm945 = vcmp.ge.f32.partialorder %v881, 0.0
        %vm946 = vcmp.ge.f32.partialorder %v882, 0.0
        %v947 = vmul.f32 %v819, 0.01
        %v948 = vmul.f32 %v820, 0.01
        %v949 = vmul.f32 %v821, 0.01
        %v950 = vmul.f32 %v822, 0.01
        %v951 = vmul.f32 %v823, 0.01
        %v952 = vmul.f32 %v824, 0.01
        %v953 = vmul.f32 %v825, 0.01
        %v954 = vmul.f32 %v826, 0.01
        %v955 = vmul.f32 %v827, 0.01
        %v956 = vmul.f32 %v828, 0.01
        %v957 = vmul.f32 %v829, 0.01
        %v958 = vmul.f32 %v830, 0.01
        %v959 = vmul.f32 %v831, 0.01
        %v960 = vmul.f32 %v832, 0.01
        %v961 = vmul.f32 %v833, 0.01
        %v962 = vmul.f32 %v834, 0.01
        %v963 = vmul.f32 %v835, 0.01
        %v964 = vmul.f32 %v836, 0.01
        %v965 = vmul.f32 %v837, 0.01
        %v966 = vmul.f32 %v838, 0.01
        %v967 = vmul.f32 %v839, 0.01
        %v968 = vmul.f32 %v840, 0.01
        %v969 = vmul.f32 %v841, 0.01
        %v970 = vmul.f32 %v842, 0.01
        %v971 = vmul.f32 %v843, 0.01
        %v972 = vmul.f32 %v844, 0.01
        %v973 = vmul.f32 %v845, 0.01
        %v974 = vmul.f32 %v846, 0.01
        %v975 = vmul.f32 %v847, 0.01
        %v976 = vmul.f32 %v848, 0.01
        %v977 = vmul.f32 %v849, 0.01
        %v978 = vmul.f32 %v850, 0.01
        %v979 = vmul.f32 %v851, 0.01
        %v980 = vmul.f32 %v852, 0.01
        %v981 = vmul.f32 %v853, 0.01
        %v982 = vmul.f32 %v854, 0.01
        %v983 = vmul.f32 %v855, 0.01
        %v984 = vmul.f32 %v856, 0.01
        %v985 = vmul.f32 %v857, 0.01
        %v986 = vmul.f32 %v858, 0.01
        %v987 = vmul.f32 %v859, 0.01
        %v988 = vmul.f32 %v860, 0.01
        %v989 = vmul.f32 %v861, 0.01
        %v990 = vmul.f32 %v862, 0.01
        %v991 = vmul.f32 %v863, 0.01
        %v992 = vmul.f32 %v864, 0.01
        %v993 = vmul.f32 %v865, 0.01
        %v994 = vmul.f32 %v866, 0.01
        %v995 = vmul.f32 %v867, 0.01
        %v996 = vmul.f32 %v868, 0.01
        %v997 = vmul.f32 %v869, 0.01
        %v998 = vmul.f32 %v870, 0.01
        %v999 = vmul.f32 %v871, 0.01
        %v1000 = vmul.f32 %v872, 0.01
        %v1001 = vmul.f32 %v873, 0.01
        %v1002 = vmul.f32 %v874, 0.01
        %v1003 = vmul.f32 %v875, 0.01
        %v1004 = vmul.f32 %v876, 0.01
        %v1005 = vmul.f32 %v877, 0.01
        %v1006 = vmul.f32 %v878, 0.01
        %v1007 = vmul.f32 %v879, 0.01
        %v1008 = vmul.f32 %v880, 0.01
        %v1009 = vmul.f32 %v881, 0.01
        %v1010 = vmul.f32 %v882, 0.01
        %v1011 = vsel %vm883, %v819, %v947
        %v1012 = vsel %vm884, %v820, %v948
        %v1013 = vsel %vm885, %v821, %v949
        %v1014 = vsel %vm886, %v822, %v950
        %v1015 = vsel %vm887, %v823, %v951
        %v1016 = vsel %vm888, %v824, %v952
        %v1017 = vsel %vm889, %v825, %v953
        %v1018 = vsel %vm890, %v826, %v954
        %v1019 = vsel %vm891, %v827, %v955
        %v1020 = vsel %vm892, %v828, %v956
        %v1021 = vsel %vm893, %v829, %v957
        %v1022 = vsel %vm894, %v830, %v958
        %v1023 = vsel %vm895, %v831, %v959
        %v1024 = vsel %vm896, %v832, %v960
        %v1025 = vsel %vm897, %v833, %v961
        %v1026 = vsel %vm898, %v834, %v962
        %v1027 = vsel %vm899, %v835, %v963
        %v1028 = vsel %vm900, %v836, %v964
        %v1029 = vsel %vm901, %v837, %v965
        %v1030 = vsel %vm902, %v838, %v966
        %v1031 = vsel %vm903, %v839, %v967
        %v1032 = vsel %vm904, %v840, %v968
        %v1033 = vsel %vm905, %v841, %v969
        %v1034 = vsel %vm906, %v842, %v970
        %v1035 = vsel %vm907, %v843, %v971
        %v1036 = vsel %vm908, %v844, %v972
        %v1037 = vsel %vm909, %v845, %v973
        %v1038 = vsel %vm910, %v846, %v974
        %v1039 = vsel %vm911, %v847, %v975
        %v1040 = vsel %vm912, %v848, %v976
        %v1041 = vsel %vm913, %v849, %v977
        %v1042 = vsel %vm914, %v850, %v978
        %v1043 = vsel %vm915, %v851, %v979
        %v1044 = vsel %vm916, %v852, %v980
        %v1045 = vsel %vm917, %v853, %v981
        %v1046 = vsel %vm918, %v854, %v982
        %v1047 = vsel %vm919, %v855, %v983
        %v1048 = vsel %vm920, %v856, %v984
        %v1049 = vsel %vm921, %v857, %v985
        %v1050 = vsel %vm922, %v858, %v986
        %v1051 = vsel %vm923, %v859, %v987
        %v1052 = vsel %vm924, %v860, %v988
        %v1053 = vsel %vm925, %v861, %v989
        %v1054 = vsel %vm926, %v862, %v990
        %v1055 = vsel %vm927, %v863, %v991
        %v1056 = vsel %vm928, %v864, %v992
        %v1057 = vsel %vm929, %v865, %v993
        %v1058 = vsel %vm930, %v866, %v994
        %v1059 = vsel %vm931, %v867, %v995
        %v1060 = vsel %vm932, %v868, %v996
        %v1061 = vsel %vm933, %v869, %v997
        %v1062 = vsel %vm934, %v870, %v998
        %v1063 = vsel %vm935, %v871, %v999
        %v1064 = vsel %vm936, %v872, %v1000
        %v1065 = vsel %vm937, %v873, %v1001
        %v1066 = vsel %vm938, %v874, %v1002
        %v1067 = vsel %vm939, %v875, %v1003
        %v1068 = vsel %vm940, %v876, %v1004
        %v1069 = vsel %vm941, %v877, %v1005
        %v1070 = vsel %vm942, %v878, %v1006
        %v1071 = vsel %vm943, %v879, %v1007
        %v1072 = vsel %vm944, %v880, %v1008
        %v1073 = vsel %vm945, %v881, %v1009
        %v1074 = vsel %vm946, %v882, %v1010
        %v1075 = vpack.c.bf16 %v1013, %v1011
        %v1076 = vpack.c.bf16 %v1014, %v1012
        %v1077 = vpack.c.bf16 %v1017, %v1015
        %v1078 = vpack.c.bf16 %v1018, %v1016
        %v1079 = vpack.c.bf16 %v1021, %v1019
        %v1080 = vpack.c.bf16 %v1022, %v1020
        %v1081 = vpack.c.bf16 %v1025, %v1023
        %v1082 = vpack.c.bf16 %v1026, %v1024
        %v1083 = vpack.c.bf16 %v1029, %v1027
        %v1084 = vpack.c.bf16 %v1030, %v1028
        %v1085 = vpack.c.bf16 %v1033, %v1031
        %v1086 = vpack.c.bf16 %v1034, %v1032
        %v1087 = vpack.c.bf16 %v1037, %v1035
        %v1088 = vpack.c.bf16 %v1038, %v1036
        %v1089 = vpack.c.bf16 %v1041, %v1039
        %v1090 = vpack.c.bf16 %v1042, %v1040
        %v1091 = vpack.c.bf16 %v1045, %v1043
        %v1092 = vpack.c.bf16 %v1046, %v1044
        %v1093 = vpack.c.bf16 %v1049, %v1047
        %v1094 = vpack.c.bf16 %v1050, %v1048
        %v1095 = vpack.c.bf16 %v1053, %v1051
        %v1096 = vpack.c.bf16 %v1054, %v1052
        %v1097 = vpack.c.bf16 %v1057, %v1055
        %v1098 = vpack.c.bf16 %v1058, %v1056
        %v1099 = vpack.c.bf16 %v1061, %v1059
        %v1100 = vpack.c.bf16 %v1062, %v1060
        %v1101 = vpack.c.bf16 %v1065, %v1063
        %v1102 = vpack.c.bf16 %v1066, %v1064
        %v1103 = vpack.c.bf16 %v1069, %v1067
        %v1104 = vpack.c.bf16 %v1070, %v1068
        %v1105 = vpack.c.bf16 %v1073, %v1071
        %v1106 = vpack.c.bf16 %v1074, %v1072
        %v1107 = vld [vmem:[#allocation8] sm:$0xf]
        %v1108 = vld [vmem:[#allocation8 + $0x4] sm:$0xf]
        %v1109 = vld [vmem:[#allocation8 + $0x8] sm:$0xf]
        %v1110 = vld [vmem:[#allocation8 + $0xc] sm:$0xf]
        %v1111 = vld [vmem:[#allocation8 + $0x10] sm:$0xf]
        %v1112 = vld [vmem:[#allocation8 + $0x14] sm:$0xf]
        %v1113 = vld [vmem:[#allocation8 + $0x18] sm:$0xf]
        %v1114 = vld [vmem:[#allocation8 + $0x1c] sm:$0xf]
        %v1115 = vld [vmem:[#allocation8 + $0x20] sm:$0xf]
        %v1116 = vld [vmem:[#allocation8 + $0x24] sm:$0xf]
        %v1117 = vld [vmem:[#allocation8 + $0x28] sm:$0xf]
        %v1118 = vld [vmem:[#allocation8 + $0x2c] sm:$0xf]
        %v1119 = vld [vmem:[#allocation8 + $0x30] sm:$0xf]
        %v1120 = vld [vmem:[#allocation8 + $0x34] sm:$0xf]
        %v1121 = vld [vmem:[#allocation8 + $0x38] sm:$0xf]
        %v1122 = vld [vmem:[#allocation8 + $0x3c] sm:$0xf]
        %v1123 = vld [vmem:[#allocation8 + $0x40] sm:$0xf]
        %v1124 = vld [vmem:[#allocation8 + $0x44] sm:$0xf]
        %v1125 = vld [vmem:[#allocation8 + $0x48] sm:$0xf]
        %v1126 = vld [vmem:[#allocation8 + $0x4c] sm:$0xf]
        %v1127 = vld [vmem:[#allocation8 + $0x50] sm:$0xf]
        %v1128 = vld [vmem:[#allocation8 + $0x54] sm:$0xf]
        %v1129 = vld [vmem:[#allocation8 + $0x58] sm:$0xf]
        %v1130 = vld [vmem:[#allocation8 + $0x5c] sm:$0xf]
        %v1131 = vld [vmem:[#allocation8 + $0x60] sm:$0xf]
        %v1132 = vld [vmem:[#allocation8 + $0x64] sm:$0xf]
        %v1133 = vld [vmem:[#allocation8 + $0x68] sm:$0xf]
        %v1134 = vld [vmem:[#allocation8 + $0x6c] sm:$0xf]
        %v1135 = vld [vmem:[#allocation8 + $0x70] sm:$0xf]
        %v1136 = vld [vmem:[#allocation8 + $0x74] sm:$0xf]
        %v1137 = vld [vmem:[#allocation8 + $0x78] sm:$0xf]
        %v1138 = vld [vmem:[#allocation8 + $0x7c] sm:$0xf]
        %v1171 = vunpack.c.l.b16 %v1107
        %v1172 = vunpack.c.l.b16 %v1108
        %v1173 = vunpack.c.l.b16 %v1109
        %v1174 = vunpack.c.l.b16 %v1110
        %v1175 = vunpack.c.l.b16 %v1111
        %v1176 = vunpack.c.l.b16 %v1112
        %v1177 = vunpack.c.l.b16 %v1113
        %v1178 = vunpack.c.l.b16 %v1114
        %v1179 = vunpack.c.l.b16 %v1115
        %v1180 = vunpack.c.l.b16 %v1116
        %v1181 = vunpack.c.l.b16 %v1117
        %v1182 = vunpack.c.l.b16 %v1118
        %v1183 = vunpack.c.l.b16 %v1119
        %v1184 = vunpack.c.l.b16 %v1120
        %v1185 = vunpack.c.l.b16 %v1121
        %v1186 = vunpack.c.l.b16 %v1122
        %v1187 = vunpack.c.l.b16 %v1123
        %v1188 = vunpack.c.l.b16 %v1124
        %v1189 = vunpack.c.l.b16 %v1125
        %v1190 = vunpack.c.l.b16 %v1126
        %v1191 = vunpack.c.l.b16 %v1127
        %v1192 = vunpack.c.l.b16 %v1128
        %v1193 = vunpack.c.l.b16 %v1129
        %v1194 = vunpack.c.l.b16 %v1130
        %v1195 = vunpack.c.l.b16 %v1131
        %v1196 = vunpack.c.l.b16 %v1132
        %v1197 = vunpack.c.l.b16 %v1133
        %v1198 = vunpack.c.l.b16 %v1134
        %v1199 = vunpack.c.l.b16 %v1135
        %v1200 = vunpack.c.l.b16 %v1136
        %v1201 = vunpack.c.l.b16 %v1137
        %v1202 = vunpack.c.l.b16 %v1138
        %v1203 = vpack.c.b16 %v1172, %v1171
        %v1204 = vpack.c.b16 %v1174, %v1173
        %v1205 = vpack.c.b16 %v1176, %v1175
        %v1206 = vpack.c.b16 %v1178, %v1177
        %v1207 = vpack.c.b16 %v1180, %v1179
        %v1208 = vpack.c.b16 %v1182, %v1181
        %v1209 = vpack.c.b16 %v1184, %v1183
        %v1210 = vpack.c.b16 %v1186, %v1185
        %v1211 = vpack.c.b16 %v1188, %v1187
        %v1212 = vpack.c.b16 %v1190, %v1189
        %v1213 = vpack.c.b16 %v1192, %v1191
        %v1214 = vpack.c.b16 %v1194, %v1193
        %v1215 = vpack.c.b16 %v1196, %v1195
        %v1216 = vpack.c.b16 %v1198, %v1197
        %v1217 = vpack.c.b16 %v1200, %v1199
        %v1218 = vpack.c.b16 %v1202, %v1201
        %1235 = vmatprep.subr.bf16.mxu0 0
        %1236 = vmatpush1.bf16.msra.mxu0 %v1203
        %1237 = vmatprep.subr.bf16.mxu0 0
        %1238 = vmatpush1.bf16.msra.mxu0 %v1204
        %1239 = vmatprep.subr.bf16.mxu0 0
        %1240 = vmatpush1.bf16.msra.mxu0 %v1205
        %1241 = vmatprep.subr.bf16.mxu0 0
        %1242 = vmatpush1.bf16.msra.mxu0 %v1206
        %1243 = vmatprep.subr.bf16.mxu0 0
        %1244 = vmatpush1.bf16.msra.mxu0 %v1207
        %1245 = vmatprep.subr.bf16.mxu0 0
        %1246 = vmatpush1.bf16.msra.mxu0 %v1208
        %1247 = vmatprep.subr.bf16.mxu0 0
        %1248 = vmatpush1.bf16.msra.mxu0 %v1209
        %1249 = vmatprep.subr.bf16.mxu0 0
        %1250 = vmatpush1.bf16.msra.mxu0 %v1210
        %1251 = vmatprep.subr.bf16.mxu0 0
        %1252 = vmatpush1.bf16.msra.mxu0 %v1211
        %1253 = vmatprep.subr.bf16.mxu0 0
        %1254 = vmatpush1.bf16.msra.mxu0 %v1212
        %1255 = vmatprep.subr.bf16.mxu0 0
        %1256 = vmatpush1.bf16.msra.mxu0 %v1213
        %1257 = vmatprep.subr.bf16.mxu0 0
        %1258 = vmatpush1.bf16.msra.mxu0 %v1214
        %1259 = vmatprep.subr.bf16.mxu0 0
        %1260 = vmatpush1.bf16.msra.mxu0 %v1215
        %1261 = vmatprep.subr.bf16.mxu0 0
        %1262 = vmatpush1.bf16.msra.mxu0 %v1216
        %1263 = vmatprep.subr.bf16.mxu0 0
        %1264 = vmatpush1.bf16.msra.mxu0 %v1217
        %1265 = vmatprep.subr.bf16.mxu0 0
        %1266 = vmatpush1.bf16.msra.mxu0 %v1218
        %1267 = vmatprep.mubr.bf16.mxu0 %v1076
        %1268 = vmatmul.mubr.bf16.gmra.mrb[0].mxu0 %v1075
        %v1269 = vpop.f32.mrb[0].mxu0
        %v1270 = vadd.f32 0.0, %v1269
        %v1271 = vpop.f32.mrb[0].mxu0
        %v1272 = vpop.f32.mrb[0].mxu0
        %v1273 = vadd.f32 0.0, %v1272
        %v1274 = vpop.f32.mrb[0].mxu0
        %1275 = vmatprep.mubr.bf16.mxu0 %v1078
        %1276 = vmatmul.mubr.bf16.gmra.mrb[0].mxu0 %v1077
        %v1277 = vpop.f32.mrb[0].mxu0
        %v1278 = vadd.f32 0.0, %v1277
        %v1279 = vpop.f32.mrb[0].mxu0
        %v1280 = vpop.f32.mrb[0].mxu0
        %v1281 = vadd.f32 0.0, %v1280
        %v1282 = vpop.f32.mrb[0].mxu0
        %1283 = vmatprep.mubr.bf16.mxu0 %v1080
        %1284 = vmatmul.mubr.bf16.gmra.mrb[0].mxu0 %v1079
        %v1285 = vpop.f32.mrb[0].mxu0
        %v1286 = vadd.f32 0.0, %v1285
        %v1287 = vpop.f32.mrb[0].mxu0
        %v1288 = vpop.f32.mrb[0].mxu0
        %v1289 = vadd.f32 0.0, %v1288
        %v1290 = vpop.f32.mrb[0].mxu0
        %1291 = vmatprep.mubr.bf16.mxu0 %v1082
        %1292 = vmatmul.mubr.bf16.gmra.mrb[0].mxu0 %v1081
        %v1293 = vpop.f32.mrb[0].mxu0
        %v1294 = vadd.f32 0.0, %v1293
        %v1295 = vpop.f32.mrb[0].mxu0
        %v1296 = vpop.f32.mrb[0].mxu0
        %v1297 = vadd.f32 0.0, %v1296
        %v1298 = vpop.f32.mrb[0].mxu0
        %1299 = vmatprep.mubr.bf16.mxu0 %v1084
        %1300 = vmatmul.mubr.bf16.gmra.mrb[0].mxu0 %v1083
        %v1301 = vpop.f32.mrb[0].mxu0
        %v1302 = vadd.f32 0.0, %v1301
        %v1303 = vpop.f32.mrb[0].mxu0
        %v1304 = vpop.f32.mrb[0].mxu0
        %v1305 = vadd.f32 0.0, %v1304
        %v1306 = vpop.f32.mrb[0].mxu0
        %1307 = vmatprep.mubr.bf16.mxu0 %v1086
        %1308 = vmatmul.mubr.bf16.gmra.mrb[0].mxu0 %v1085
        %v1309 = vpop.f32.mrb[0].mxu0
        %v1310 = vadd.f32 0.0, %v1309
        %v1311 = vpop.f32.mrb[0].mxu0
        %v1312 = vpop.f32.mrb[0].mxu0
        %v1313 = vadd.f32 0.0, %v1312
        %v1314 = vpop.f32.mrb[0].mxu0
        %1315 = vmatprep.mubr.bf16.mxu0 %v1088
        %1316 = vmatmul.mubr.bf16.gmra.mrb[0].mxu0 %v1087
        %v1317 = vpop.f32.mrb[0].mxu0
        %v1318 = vadd.f32 0.0, %v1317
        %v1319 = vpop.f32.mrb[0].mxu0
        %v1320 = vpop.f32.mrb[0].mxu0
        %v1321 = vadd.f32 0.0, %v1320
        %v1322 = vpop.f32.mrb[0].mxu0
        %1323 = vmatprep.mubr.bf16.mxu0 %v1090
        %1324 = vmatmul.mubr.bf16.gmra.mrb[0].mxu0 %v1089
        %v1325 = vpop.f32.mrb[0].mxu0
        %v1326 = vadd.f32 0.0, %v1325
        %v1327 = vpop.f32.mrb[0].mxu0
        %v1328 = vpop.f32.mrb[0].mxu0
        %v1329 = vadd.f32 0.0, %v1328
        %v1330 = vpop.f32.mrb[0].mxu0
        %1331 = vmatprep.mubr.bf16.mxu0 %v1092
        %1332 = vmatmul.mubr.bf16.gmra.mrb[0].mxu0 %v1091
        %v1333 = vpop.f32.mrb[0].mxu0
        %v1334 = vadd.f32 0.0, %v1333
        %v1335 = vpop.f32.mrb[0].mxu0
        %v1336 = vpop.f32.mrb[0].mxu0
        %v1337 = vadd.f32 0.0, %v1336
        %v1338 = vpop.f32.mrb[0].mxu0
        %1339 = vmatprep.mubr.bf16.mxu0 %v1094
        %1340 = vmatmul.mubr.bf16.gmra.mrb[0].mxu0 %v1093
        %v1341 = vpop.f32.mrb[0].mxu0
        %v1342 = vadd.f32 0.0, %v1341
        %v1343 = vpop.f32.mrb[0].mxu0
        %v1344 = vpop.f32.mrb[0].mxu0
        %v1345 = vadd.f32 0.0, %v1344
        %v1346 = vpop.f32.mrb[0].mxu0
        %1347 = vmatprep.mubr.bf16.mxu0 %v1096
        %1348 = vmatmul.mubr.bf16.gmra.mrb[0].mxu0 %v1095
        %v1349 = vpop.f32.mrb[0].mxu0
        %v1350 = vadd.f32 0.0, %v1349
        %v1351 = vpop.f32.mrb[0].mxu0
        %v1352 = vpop.f32.mrb[0].mxu0
        %v1353 = vadd.f32 0.0, %v1352
        %v1354 = vpop.f32.mrb[0].mxu0
        %1355 = vmatprep.mubr.bf16.mxu0 %v1098
        %1356 = vmatmul.mubr.bf16.gmra.mrb[0].mxu0 %v1097
        %v1357 = vpop.f32.mrb[0].mxu0
        %v1358 = vadd.f32 0.0, %v1357
        %v1359 = vpop.f32.mrb[0].mxu0
        %v1360 = vpop.f32.mrb[0].mxu0
        %v1361 = vadd.f32 0.0, %v1360
        %v1362 = vpop.f32.mrb[0].mxu0
        %1363 = vmatprep.mubr.bf16.mxu0 %v1100
        %1364 = vmatmul.mubr.bf16.gmra.mrb[0].mxu0 %v1099
        %v1365 = vpop.f32.mrb[0].mxu0
        %v1366 = vadd.f32 0.0, %v1365
        %v1367 = vpop.f32.mrb[0].mxu0
        %v1368 = vpop.f32.mrb[0].mxu0
        %v1369 = vadd.f32 0.0, %v1368
        %v1370 = vpop.f32.mrb[0].mxu0
        %1371 = vmatprep.mubr.bf16.mxu0 %v1102
        %1372 = vmatmul.mubr.bf16.gmra.mrb[0].mxu0 %v1101
        %v1373 = vpop.f32.mrb[0].mxu0
        %v1374 = vadd.f32 0.0, %v1373
        %v1375 = vpop.f32.mrb[0].mxu0
        %v1376 = vpop.f32.mrb[0].mxu0
        %v1377 = vadd.f32 0.0, %v1376
        %v1378 = vpop.f32.mrb[0].mxu0
        %1379 = vmatprep.mubr.bf16.mxu0 %v1104
        %1380 = vmatmul.mubr.bf16.gmra.mrb[0].mxu0 %v1103
        %v1381 = vpop.f32.mrb[0].mxu0
        %v1382 = vadd.f32 0.0, %v1381
        %v1383 = vpop.f32.mrb[0].mxu0
        %v1384 = vpop.f32.mrb[0].mxu0
        %v1385 = vadd.f32 0.0, %v1384
        %v1386 = vpop.f32.mrb[0].mxu0
        %1387 = vmatprep.mubr.bf16.mxu0 %v1106
        %1388 = vmatmul.mubr.bf16.gmra.mrb[0].mxu0 %v1105
        %v1389 = vpop.f32.mrb[0].mxu0
        %v1390 = vadd.f32 0.0, %v1389
        %v1391 = vpop.f32.mrb[0].mxu0
        %v1392 = vpop.f32.mrb[0].mxu0
        %v1393 = vadd.f32 0.0, %v1392
        %v1394 = vpop.f32.mrb[0].mxu0
        %1395 = vdwg.mxu0
        %v1396 = vld [vmem:[%s4] sm:$0x1]
        %v1397 = vlaneseq
        %v1398 = vshrl.u32 %v1397, 7
        %v1399 = vsub.s32 0, %v1398
        %v1400 = vrot.slane %v1396, %v1399
        %v1401 = vmul.f32 %v1270, %v1400
        %v1402 = vmul.f32 %v1273, %v1400
        %v1403 = vmul.f32 %v1278, %v1400
        %v1404 = vmul.f32 %v1281, %v1400
        %v1405 = vmul.f32 %v1286, %v1400
        %v1406 = vmul.f32 %v1289, %v1400
        %v1407 = vmul.f32 %v1294, %v1400
        %v1408 = vmul.f32 %v1297, %v1400
        %v1409 = vmul.f32 %v1302, %v1400
        %v1410 = vmul.f32 %v1305, %v1400
        %v1411 = vmul.f32 %v1310, %v1400
        %v1412 = vmul.f32 %v1313, %v1400
        %v1413 = vmul.f32 %v1318, %v1400
        %v1414 = vmul.f32 %v1321, %v1400
        %v1415 = vmul.f32 %v1326, %v1400
        %v1416 = vmul.f32 %v1329, %v1400
        %v1417 = vmul.f32 %v1334, %v1400
        %v1418 = vmul.f32 %v1337, %v1400
        %v1419 = vmul.f32 %v1342, %v1400
        %v1420 = vmul.f32 %v1345, %v1400
        %v1421 = vmul.f32 %v1350, %v1400
        %v1422 = vmul.f32 %v1353, %v1400
        %v1423 = vmul.f32 %v1358, %v1400
        %v1424 = vmul.f32 %v1361, %v1400
        %v1425 = vmul.f32 %v1366, %v1400
        %v1426 = vmul.f32 %v1369, %v1400
        %v1427 = vmul.f32 %v1374, %v1400
        %v1428 = vmul.f32 %v1377, %v1400
        %v1429 = vmul.f32 %v1382, %v1400
        %v1430 = vmul.f32 %v1385, %v1400
        %v1431 = vmul.f32 %v1390, %v1400
        %v1432 = vmul.f32 %v1393, %v1400
        %v1433 = vld [vmem:[%s4 + $0x1] sm:$0x1]
        %v1434 = vlaneseq
        %v1435 = vshrl.u32 %v1434, 7
        %v1436 = vsub.s32 0, %v1435
        %v1437 = vrot.slane %v1433, %v1436
        %v1438 = vadd.f32 %v1401, %v1437
        %v1439 = vadd.f32 %v1402, %v1437
        %v1440 = vadd.f32 %v1403, %v1437
        %v1441 = vadd.f32 %v1404, %v1437
        %v1442 = vadd.f32 %v1405, %v1437
        %v1443 = vadd.f32 %v1406, %v1437
        %v1444 = vadd.f32 %v1407, %v1437
        %v1445 = vadd.f32 %v1408, %v1437
        %v1446 = vadd.f32 %v1409, %v1437
        %v1447 = vadd.f32 %v1410, %v1437
        %v1448 = vadd.f32 %v1411, %v1437
        %v1449 = vadd.f32 %v1412, %v1437
        %v1450 = vadd.f32 %v1413, %v1437
        %v1451 = vadd.f32 %v1414, %v1437
        %v1452 = vadd.f32 %v1415, %v1437
        %v1453 = vadd.f32 %v1416, %v1437
        %v1454 = vadd.f32 %v1417, %v1437
        %v1455 = vadd.f32 %v1418, %v1437
        %v1456 = vadd.f32 %v1419, %v1437
        %v1457 = vadd.f32 %v1420, %v1437
        %v1458 = vadd.f32 %v1421, %v1437
        %v1459 = vadd.f32 %v1422, %v1437
        %v1460 = vadd.f32 %v1423, %v1437
        %v1461 = vadd.f32 %v1424, %v1437
        %v1462 = vadd.f32 %v1425, %v1437
        %v1463 = vadd.f32 %v1426, %v1437
        %v1464 = vadd.f32 %v1427, %v1437
        %v1465 = vadd.f32 %v1428, %v1437
        %v1466 = vadd.f32 %v1429, %v1437
        %v1467 = vadd.f32 %v1430, %v1437
        %v1468 = vadd.f32 %v1431, %v1437
        %v1469 = vadd.f32 %v1432, %v1437
        %vm1470 = vcmp.ge.f32.partialorder %v1438, 0.0
        %vm1471 = vcmp.ge.f32.partialorder %v1439, 0.0
        %vm1472 = vcmp.ge.f32.partialorder %v1440, 0.0
        %vm1473 = vcmp.ge.f32.partialorder %v1441, 0.0
        %vm1474 = vcmp.ge.f32.partialorder %v1442, 0.0
        %vm1475 = vcmp.ge.f32.partialorder %v1443, 0.0
        %vm1476 = vcmp.ge.f32.partialorder %v1444, 0.0
        %vm1477 = vcmp.ge.f32.partialorder %v1445, 0.0
        %vm1478 = vcmp.ge.f32.partialorder %v1446, 0.0
        %vm1479 = vcmp.ge.f32.partialorder %v1447, 0.0
        %vm1480 = vcmp.ge.f32.partialorder %v1448, 0.0
        %vm1481 = vcmp.ge.f32.partialorder %v1449, 0.0
        %vm1482 = vcmp.ge.f32.partialorder %v1450, 0.0
        %vm1483 = vcmp.ge.f32.partialorder %v1451, 0.0
        %vm1484 = vcmp.ge.f32.partialorder %v1452, 0.0
        %vm1485 = vcmp.ge.f32.partialorder %v1453, 0.0
        %vm1486 = vcmp.ge.f32.partialorder %v1454, 0.0
        %vm1487 = vcmp.ge.f32.partialorder %v1455, 0.0
        %vm1488 = vcmp.ge.f32.partialorder %v1456, 0.0
        %vm1489 = vcmp.ge.f32.partialorder %v1457, 0.0
        %vm1490 = vcmp.ge.f32.partialorder %v1458, 0.0
        %vm1491 = vcmp.ge.f32.partialorder %v1459, 0.0
        %vm1492 = vcmp.ge.f32.partialorder %v1460, 0.0
        %vm1493 = vcmp.ge.f32.partialorder %v1461, 0.0
        %vm1494 = vcmp.ge.f32.partialorder %v1462, 0.0
        %vm1495 = vcmp.ge.f32.partialorder %v1463, 0.0
        %vm1496 = vcmp.ge.f32.partialorder %v1464, 0.0
        %vm1497 = vcmp.ge.f32.partialorder %v1465, 0.0
        %vm1498 = vcmp.ge.f32.partialorder %v1466, 0.0
        %vm1499 = vcmp.ge.f32.partialorder %v1467, 0.0
        %vm1500 = vcmp.ge.f32.partialorder %v1468, 0.0
        %vm1501 = vcmp.ge.f32.partialorder %v1469, 0.0
        %v1502 = vmul.f32 %v1438, 0.01
        %v1503 = vmul.f32 %v1439, 0.01
        %v1504 = vmul.f32 %v1440, 0.01
        %v1505 = vmul.f32 %v1441, 0.01
        %v1506 = vmul.f32 %v1442, 0.01
        %v1507 = vmul.f32 %v1443, 0.01
        %v1508 = vmul.f32 %v1444, 0.01
        %v1509 = vmul.f32 %v1445, 0.01
        %v1510 = vmul.f32 %v1446, 0.01
        %v1511 = vmul.f32 %v1447, 0.01
        %v1512 = vmul.f32 %v1448, 0.01
        %v1513 = vmul.f32 %v1449, 0.01
        %v1514 = vmul.f32 %v1450, 0.01
        %v1515 = vmul.f32 %v1451, 0.01
        %v1516 = vmul.f32 %v1452, 0.01
        %v1517 = vmul.f32 %v1453, 0.01
        %v1518 = vmul.f32 %v1454, 0.01
        %v1519 = vmul.f32 %v1455, 0.01
        %v1520 = vmul.f32 %v1456, 0.01
        %v1521 = vmul.f32 %v1457, 0.01
        %v1522 = vmul.f32 %v1458, 0.01
        %v1523 = vmul.f32 %v1459, 0.01
        %v1524 = vmul.f32 %v1460, 0.01
        %v1525 = vmul.f32 %v1461, 0.01
        %v1526 = vmul.f32 %v1462, 0.01
        %v1527 = vmul.f32 %v1463, 0.01
        %v1528 = vmul.f32 %v1464, 0.01
        %v1529 = vmul.f32 %v1465, 0.01
        %v1530 = vmul.f32 %v1466, 0.01
        %v1531 = vmul.f32 %v1467, 0.01
        %v1532 = vmul.f32 %v1468, 0.01
        %v1533 = vmul.f32 %v1469, 0.01
        %v1534 = vsel %vm1470, %v1438, %v1502
        %v1535 = vsel %vm1471, %v1439, %v1503
        %v1536 = vsel %vm1472, %v1440, %v1504
        %v1537 = vsel %vm1473, %v1441, %v1505
        %v1538 = vsel %vm1474, %v1442, %v1506
        %v1539 = vsel %vm1475, %v1443, %v1507
        %v1540 = vsel %vm1476, %v1444, %v1508
        %v1541 = vsel %vm1477, %v1445, %v1509
        %v1542 = vsel %vm1478, %v1446, %v1510
        %v1543 = vsel %vm1479, %v1447, %v1511
        %v1544 = vsel %vm1480, %v1448, %v1512
        %v1545 = vsel %vm1481, %v1449, %v1513
        %v1546 = vsel %vm1482, %v1450, %v1514
        %v1547 = vsel %vm1483, %v1451, %v1515
        %v1548 = vsel %vm1484, %v1452, %v1516
        %v1549 = vsel %vm1485, %v1453, %v1517
        %v1550 = vsel %vm1486, %v1454, %v1518
        %v1551 = vsel %vm1487, %v1455, %v1519
        %v1552 = vsel %vm1488, %v1456, %v1520
        %v1553 = vsel %vm1489, %v1457, %v1521
        %v1554 = vsel %vm1490, %v1458, %v1522
        %v1555 = vsel %vm1491, %v1459, %v1523
        %v1556 = vsel %vm1492, %v1460, %v1524
        %v1557 = vsel %vm1493, %v1461, %v1525
        %v1558 = vsel %vm1494, %v1462, %v1526
        %v1559 = vsel %vm1495, %v1463, %v1527
        %v1560 = vsel %vm1496, %v1464, %v1528
        %v1561 = vsel %vm1497, %v1465, %v1529
        %v1562 = vsel %vm1498, %v1466, %v1530
        %v1563 = vsel %vm1499, %v1467, %v1531
        %v1564 = vsel %vm1500, %v1468, %v1532
        %v1565 = vsel %vm1501, %v1469, %v1533
        %v1566 = vpack.c.bf16 %v1535, %v1534
        %v1567 = vpack.c.bf16 %v1537, %v1536
        %v1568 = vpack.c.bf16 %v1539, %v1538
        %v1569 = vpack.c.bf16 %v1541, %v1540
        %v1570 = vpack.c.bf16 %v1543, %v1542
        %v1571 = vpack.c.bf16 %v1545, %v1544
        %v1572 = vpack.c.bf16 %v1547, %v1546
        %v1573 = vpack.c.bf16 %v1549, %v1548
        %v1574 = vpack.c.bf16 %v1551, %v1550
        %v1575 = vpack.c.bf16 %v1553, %v1552
        %v1576 = vpack.c.bf16 %v1555, %v1554
        %v1577 = vpack.c.bf16 %v1557, %v1556
        %v1578 = vpack.c.bf16 %v1559, %v1558
        %v1579 = vpack.c.bf16 %v1561, %v1560
        %v1580 = vpack.c.bf16 %v1563, %v1562
        %v1581 = vpack.c.bf16 %v1565, %v1564
        %v1582 = vld [vmem:[%s5] sm:$0xf]
        %v1583 = vld [vmem:[%s5 + $0x4] sm:$0xf]
        %v1584 = vld [vmem:[%s5 + $0x8] sm:$0xf]
        %v1585 = vld [vmem:[%s5 + $0xc] sm:$0xf]
        %v1586 = vld [vmem:[%s5 + $0x10] sm:$0xf]
        %v1587 = vld [vmem:[%s5 + $0x14] sm:$0xf]
        %v1588 = vld [vmem:[%s5 + $0x18] sm:$0xf]
        %v1589 = vld [vmem:[%s5 + $0x1c] sm:$0xf]
        %v1590 = vld [vmem:[%s5 + $0x20] sm:$0xf]
        %v1591 = vld [vmem:[%s5 + $0x24] sm:$0xf]
        %v1592 = vld [vmem:[%s5 + $0x28] sm:$0xf]
        %v1593 = vld [vmem:[%s5 + $0x2c] sm:$0xf]
        %v1594 = vld [vmem:[%s5 + $0x30] sm:$0xf]
        %v1595 = vld [vmem:[%s5 + $0x34] sm:$0xf]
        %v1596 = vld [vmem:[%s5 + $0x38] sm:$0xf]
        %v1597 = vld [vmem:[%s5 + $0x3c] sm:$0xf]
        %v1614 = vunpack.c.l.b16 %v1582
        %v1615 = vunpack.c.l.b16 %v1583
        %v1616 = vunpack.c.l.b16 %v1584
        %v1617 = vunpack.c.l.b16 %v1585
        %v1618 = vunpack.c.l.b16 %v1586
        %v1619 = vunpack.c.l.b16 %v1587
        %v1620 = vunpack.c.l.b16 %v1588
        %v1621 = vunpack.c.l.b16 %v1589
        %v1622 = vunpack.c.l.b16 %v1590
        %v1623 = vunpack.c.l.b16 %v1591
        %v1624 = vunpack.c.l.b16 %v1592
        %v1625 = vunpack.c.l.b16 %v1593
        %v1626 = vunpack.c.l.b16 %v1594
        %v1627 = vunpack.c.l.b16 %v1595
        %v1628 = vunpack.c.l.b16 %v1596
        %v1629 = vunpack.c.l.b16 %v1597
        %v1630 = vpack.c.b16 %v1615, %v1614
        %v1631 = vpack.c.b16 %v1617, %v1616
        %v1632 = vpack.c.b16 %v1619, %v1618
        %v1633 = vpack.c.b16 %v1621, %v1620
        %v1634 = vpack.c.b16 %v1623, %v1622
        %v1635 = vpack.c.b16 %v1625, %v1624
        %v1636 = vpack.c.b16 %v1627, %v1626
        %v1637 = vpack.c.b16 %v1629, %v1628
        %1646 = vmatprep.subr.bf16.mxu0 0
        %1647 = vmatpush1.bf16.msra.mxu0 %v1630
        %1648 = vmatprep.subr.bf16.mxu0 0
        %1649 = vmatpush1.bf16.msra.mxu0 %v1631
        %1650 = vmatprep.subr.bf16.mxu0 0
        %1651 = vmatpush1.bf16.msra.mxu0 %v1632
        %1652 = vmatprep.subr.bf16.mxu0 0
        %1653 = vmatpush1.bf16.msra.mxu0 %v1633
        %1654 = vmatprep.subr.bf16.mxu0 0
        %1655 = vmatpush1.bf16.msra.mxu0 %v1634
        %1656 = vmatprep.subr.bf16.mxu0 0
        %1657 = vmatpush1.bf16.msra.mxu0 %v1635
        %1658 = vmatprep.subr.bf16.mxu0 0
        %1659 = vmatpush1.bf16.msra.mxu0 %v1636
        %1660 = vmatprep.subr.bf16.mxu0 0
        %1661 = vmatpush1.bf16.msra.mxu0 %v1637
        %1662 = vmatprep.subr.bf16.mxu0 0
        %1663 = vmatpush1.bf16.msra.mxu0 0
        %1664 = vmatprep.subr.bf16.mxu0 0
        %1665 = vmatpush1.bf16.msra.mxu0 0
        %1666 = vmatprep.subr.bf16.mxu0 0
        %1667 = vmatpush1.bf16.msra.mxu0 0
        %1668 = vmatprep.subr.bf16.mxu0 0
        %1669 = vmatpush1.bf16.msra.mxu0 0
        %1670 = vmatprep.subr.bf16.mxu0 0
        %1671 = vmatpush1.bf16.msra.mxu0 0
        %1672 = vmatprep.subr.bf16.mxu0 0
        %1673 = vmatpush1.bf16.msra.mxu0 0
        %1674 = vmatprep.subr.bf16.mxu0 0
        %1675 = vmatpush1.bf16.msra.mxu0 0
        %1676 = vmatprep.subr.bf16.mxu0 0
        %1677 = vmatpush1.bf16.msra.mxu0 0
        %1678 = vmatprep.mubr.bf16.mxu0 0
        %1679 = vmatmul.mubr.bf16.gmra.mrb[0].mxu0 %v1566
        %v1680 = vpop.f32.mrb[0].mxu0
        %v1681 = vadd.f32 0.0, %v1680
        %v1682 = vpop.f32.mrb[0].mxu0
        %v1683 = vpop.f32.mrb[0].mxu0
        %v1684 = vadd.f32 0.0, %v1683
        %v1685 = vpop.f32.mrb[0].mxu0
        %1686 = vmatprep.mubr.bf16.mxu0 0
        %1687 = vmatmul.mubr.bf16.gmra.mrb[0].mxu0 %v1567
        %v1688 = vpop.f32.mrb[0].mxu0
        %v1689 = vadd.f32 0.0, %v1688
        %v1690 = vpop.f32.mrb[0].mxu0
        %v1691 = vpop.f32.mrb[0].mxu0
        %v1692 = vadd.f32 0.0, %v1691
        %v1693 = vpop.f32.mrb[0].mxu0
        %1694 = vmatprep.mubr.bf16.mxu0 0
        %1695 = vmatmul.mubr.bf16.gmra.mrb[0].mxu0 %v1568
        %v1696 = vpop.f32.mrb[0].mxu0
        %v1697 = vadd.f32 0.0, %v1696
        %v1698 = vpop.f32.mrb[0].mxu0
        %v1699 = vpop.f32.mrb[0].mxu0
        %v1700 = vadd.f32 0.0, %v1699
        %v1701 = vpop.f32.mrb[0].mxu0
        %1702 = vmatprep.mubr.bf16.mxu0 0
        %1703 = vmatmul.mubr.bf16.gmra.mrb[0].mxu0 %v1569
        %v1704 = vpop.f32.mrb[0].mxu0
        %v1705 = vadd.f32 0.0, %v1704
        %v1706 = vpop.f32.mrb[0].mxu0
        %v1707 = vpop.f32.mrb[0].mxu0
        %v1708 = vadd.f32 0.0, %v1707
        %v1709 = vpop.f32.mrb[0].mxu0
        %1710 = vmatprep.mubr.bf16.mxu0 0
        %1711 = vmatmul.mubr.bf16.gmra.mrb[0].mxu0 %v1570
        %v1712 = vpop.f32.mrb[0].mxu0
        %v1713 = vadd.f32 0.0, %v1712
        %v1714 = vpop.f32.mrb[0].mxu0
        %v1715 = vpop.f32.mrb[0].mxu0
        %v1716 = vadd.f32 0.0, %v1715
        %v1717 = vpop.f32.mrb[0].mxu0
        %1718 = vmatprep.mubr.bf16.mxu0 0
        %1719 = vmatmul.mubr.bf16.gmra.mrb[0].mxu0 %v1571
        %v1720 = vpop.f32.mrb[0].mxu0
        %v1721 = vadd.f32 0.0, %v1720
        %v1722 = vpop.f32.mrb[0].mxu0
        %v1723 = vpop.f32.mrb[0].mxu0
        %v1724 = vadd.f32 0.0, %v1723
        %v1725 = vpop.f32.mrb[0].mxu0
        %1726 = vmatprep.mubr.bf16.mxu0 0
        %1727 = vmatmul.mubr.bf16.gmra.mrb[0].mxu0 %v1572
        %v1728 = vpop.f32.mrb[0].mxu0
        %v1729 = vadd.f32 0.0, %v1728
        %v1730 = vpop.f32.mrb[0].mxu0
        %v1731 = vpop.f32.mrb[0].mxu0
        %v1732 = vadd.f32 0.0, %v1731
        %v1733 = vpop.f32.mrb[0].mxu0
        %1734 = vmatprep.mubr.bf16.mxu0 0
        %1735 = vmatmul.mubr.bf16.gmra.mrb[0].mxu0 %v1573
        %v1736 = vpop.f32.mrb[0].mxu0
        %v1737 = vadd.f32 0.0, %v1736
        %v1738 = vpop.f32.mrb[0].mxu0
        %v1739 = vpop.f32.mrb[0].mxu0
        %v1740 = vadd.f32 0.0, %v1739
        %v1741 = vpop.f32.mrb[0].mxu0
        %1742 = vmatprep.mubr.bf16.mxu0 0
        %1743 = vmatmul.mubr.bf16.gmra.mrb[0].mxu0 %v1574
        %v1744 = vpop.f32.mrb[0].mxu0
        %v1745 = vadd.f32 0.0, %v1744
        %v1746 = vpop.f32.mrb[0].mxu0
        %v1747 = vpop.f32.mrb[0].mxu0
        %v1748 = vadd.f32 0.0, %v1747
        %v1749 = vpop.f32.mrb[0].mxu0
        %1750 = vmatprep.mubr.bf16.mxu0 0
        %1751 = vmatmul.mubr.bf16.gmra.mrb[0].mxu0 %v1575
        %v1752 = vpop.f32.mrb[0].mxu0
        %v1753 = vadd.f32 0.0, %v1752
        %v1754 = vpop.f32.mrb[0].mxu0
        %v1755 = vpop.f32.mrb[0].mxu0
        %v1756 = vadd.f32 0.0, %v1755
        %v1757 = vpop.f32.mrb[0].mxu0
        %1758 = vmatprep.mubr.bf16.mxu0 0
        %1759 = vmatmul.mubr.bf16.gmra.mrb[0].mxu0 %v1576
        %v1760 = vpop.f32.mrb[0].mxu0
        %v1761 = vadd.f32 0.0, %v1760
        %v1762 = vpop.f32.mrb[0].mxu0
        %v1763 = vpop.f32.mrb[0].mxu0
        %v1764 = vadd.f32 0.0, %v1763
        %v1765 = vpop.f32.mrb[0].mxu0
        %1766 = vmatprep.mubr.bf16.mxu0 0
        %1767 = vmatmul.mubr.bf16.gmra.mrb[0].mxu0 %v1577
        %v1768 = vpop.f32.mrb[0].mxu0
        %v1769 = vadd.f32 0.0, %v1768
        %v1770 = vpop.f32.mrb[0].mxu0
        %v1771 = vpop.f32.mrb[0].mxu0
        %v1772 = vadd.f32 0.0, %v1771
        %v1773 = vpop.f32.mrb[0].mxu0
        %1774 = vmatprep.mubr.bf16.mxu0 0
        %1775 = vmatmul.mubr.bf16.gmra.mrb[0].mxu0 %v1578
        %v1776 = vpop.f32.mrb[0].mxu0
        %v1777 = vadd.f32 0.0, %v1776
        %v1778 = vpop.f32.mrb[0].mxu0
        %v1779 = vpop.f32.mrb[0].mxu0
        %v1780 = vadd.f32 0.0, %v1779
        %v1781 = vpop.f32.mrb[0].mxu0
        %1782 = vmatprep.mubr.bf16.mxu0 0
        %1783 = vmatmul.mubr.bf16.gmra.mrb[0].mxu0 %v1579
        %v1784 = vpop.f32.mrb[0].mxu0
        %v1785 = vadd.f32 0.0, %v1784
        %v1786 = vpop.f32.mrb[0].mxu0
        %v1787 = vpop.f32.mrb[0].mxu0
        %v1788 = vadd.f32 0.0, %v1787
        %v1789 = vpop.f32.mrb[0].mxu0
        %1790 = vmatprep.mubr.bf16.mxu0 0
        %1791 = vmatmul.mubr.bf16.gmra.mrb[0].mxu0 %v1580
        %v1792 = vpop.f32.mrb[0].mxu0
        %v1793 = vadd.f32 0.0, %v1792
        %v1794 = vpop.f32.mrb[0].mxu0
        %v1795 = vpop.f32.mrb[0].mxu0
        %v1796 = vadd.f32 0.0, %v1795
        %v1797 = vpop.f32.mrb[0].mxu0
        %1798 = vmatprep.mubr.bf16.mxu0 0
        %1799 = vmatmul.mubr.bf16.gmra.mrb[0].mxu0 %v1581
        %v1800 = vpop.f32.mrb[0].mxu0
        %v1801 = vadd.f32 0.0, %v1800
        %v1802 = vpop.f32.mrb[0].mxu0
        %v1803 = vpop.f32.mrb[0].mxu0
        %v1804 = vadd.f32 0.0, %v1803
        %v1805 = vpop.f32.mrb[0].mxu0
        %1806 = vdwg.mxu0
        %v1807 = vld [vmem:[%s6] sm:$0x1]
        %v1808 = vlaneseq
        %v1809 = vshrl.u32 %v1808, 7
        %v1810 = vsub.s32 0, %v1809
        %v1811 = vrot.slane %v1807, %v1810
        %v1812 = vmul.f32 %v1681, %v1811
        %v1813 = vmul.f32 %v1684, %v1811
        %v1814 = vmul.f32 %v1689, %v1811
        %v1815 = vmul.f32 %v1692, %v1811
        %v1816 = vmul.f32 %v1697, %v1811
        %v1817 = vmul.f32 %v1700, %v1811
        %v1818 = vmul.f32 %v1705, %v1811
        %v1819 = vmul.f32 %v1708, %v1811
        %v1820 = vmul.f32 %v1713, %v1811
        %v1821 = vmul.f32 %v1716, %v1811
        %v1822 = vmul.f32 %v1721, %v1811
        %v1823 = vmul.f32 %v1724, %v1811
        %v1824 = vmul.f32 %v1729, %v1811
        %v1825 = vmul.f32 %v1732, %v1811
        %v1826 = vmul.f32 %v1737, %v1811
        %v1827 = vmul.f32 %v1740, %v1811
        %v1828 = vmul.f32 %v1745, %v1811
        %v1829 = vmul.f32 %v1748, %v1811
        %v1830 = vmul.f32 %v1753, %v1811
        %v1831 = vmul.f32 %v1756, %v1811
        %v1832 = vmul.f32 %v1761, %v1811
        %v1833 = vmul.f32 %v1764, %v1811
        %v1834 = vmul.f32 %v1769, %v1811
        %v1835 = vmul.f32 %v1772, %v1811
        %v1836 = vmul.f32 %v1777, %v1811
        %v1837 = vmul.f32 %v1780, %v1811
        %v1838 = vmul.f32 %v1785, %v1811
        %v1839 = vmul.f32 %v1788, %v1811
        %v1840 = vmul.f32 %v1793, %v1811
        %v1841 = vmul.f32 %v1796, %v1811
        %v1842 = vmul.f32 %v1801, %v1811
        %v1843 = vmul.f32 %v1804, %v1811
        %v1844 = vld [vmem:[%s6 + $0x1] sm:$0x1]
        %v1845 = vlaneseq
        %v1846 = vshrl.u32 %v1845, 7
        %v1847 = vsub.s32 0, %v1846
        %v1848 = vrot.slane %v1844, %v1847
        %v1849 = vadd.f32 %v1812, %v1848
        %v1850 = vadd.f32 %v1813, %v1848
        %v1851 = vadd.f32 %v1814, %v1848
        %v1852 = vadd.f32 %v1815, %v1848
        %v1853 = vadd.f32 %v1816, %v1848
        %v1854 = vadd.f32 %v1817, %v1848
        %v1855 = vadd.f32 %v1818, %v1848
        %v1856 = vadd.f32 %v1819, %v1848
        %v1857 = vadd.f32 %v1820, %v1848
        %v1858 = vadd.f32 %v1821, %v1848
        %v1859 = vadd.f32 %v1822, %v1848
        %v1860 = vadd.f32 %v1823, %v1848
        %v1861 = vadd.f32 %v1824, %v1848
        %v1862 = vadd.f32 %v1825, %v1848
        %v1863 = vadd.f32 %v1826, %v1848
        %v1864 = vadd.f32 %v1827, %v1848
        %v1865 = vadd.f32 %v1828, %v1848
        %v1866 = vadd.f32 %v1829, %v1848
        %v1867 = vadd.f32 %v1830, %v1848
        %v1868 = vadd.f32 %v1831, %v1848
        %v1869 = vadd.f32 %v1832, %v1848
        %v1870 = vadd.f32 %v1833, %v1848
        %v1871 = vadd.f32 %v1834, %v1848
        %v1872 = vadd.f32 %v1835, %v1848
        %v1873 = vadd.f32 %v1836, %v1848
        %v1874 = vadd.f32 %v1837, %v1848
        %v1875 = vadd.f32 %v1838, %v1848
        %v1876 = vadd.f32 %v1839, %v1848
        %v1877 = vadd.f32 %v1840, %v1848
        %v1878 = vadd.f32 %v1841, %v1848
        %v1879 = vadd.f32 %v1842, %v1848
        %v1880 = vadd.f32 %v1843, %v1848
        %vm1881 = vcmp.ge.f32.partialorder %v1849, 0.0
        %vm1882 = vcmp.ge.f32.partialorder %v1850, 0.0
        %vm1883 = vcmp.ge.f32.partialorder %v1851, 0.0
        %vm1884 = vcmp.ge.f32.partialorder %v1852, 0.0
        %vm1885 = vcmp.ge.f32.partialorder %v1853, 0.0
        %vm1886 = vcmp.ge.f32.partialorder %v1854, 0.0
        %vm1887 = vcmp.ge.f32.partialorder %v1855, 0.0
        %vm1888 = vcmp.ge.f32.partialorder %v1856, 0.0
        %vm1889 = vcmp.ge.f32.partialorder %v1857, 0.0
        %vm1890 = vcmp.ge.f32.partialorder %v1858, 0.0
        %vm1891 = vcmp.ge.f32.partialorder %v1859, 0.0
        %vm1892 = vcmp.ge.f32.partialorder %v1860, 0.0
        %vm1893 = vcmp.ge.f32.partialorder %v1861, 0.0
        %vm1894 = vcmp.ge.f32.partialorder %v1862, 0.0
        %vm1895 = vcmp.ge.f32.partialorder %v1863, 0.0
        %vm1896 = vcmp.ge.f32.partialorder %v1864, 0.0
        %vm1897 = vcmp.ge.f32.partialorder %v1865, 0.0
        %vm1898 = vcmp.ge.f32.partialorder %v1866, 0.0
        %vm1899 = vcmp.ge.f32.partialorder %v1867, 0.0
        %vm1900 = vcmp.ge.f32.partialorder %v1868, 0.0
        %vm1901 = vcmp.ge.f32.partialorder %v1869, 0.0
        %vm1902 = vcmp.ge.f32.partialorder %v1870, 0.0
        %vm1903 = vcmp.ge.f32.partialorder %v1871, 0.0
        %vm1904 = vcmp.ge.f32.partialorder %v1872, 0.0
        %vm1905 = vcmp.ge.f32.partialorder %v1873, 0.0
        %vm1906 = vcmp.ge.f32.partialorder %v1874, 0.0
        %vm1907 = vcmp.ge.f32.partialorder %v1875, 0.0
        %vm1908 = vcmp.ge.f32.partialorder %v1876, 0.0
        %vm1909 = vcmp.ge.f32.partialorder %v1877, 0.0
        %vm1910 = vcmp.ge.f32.partialorder %v1878, 0.0
        %vm1911 = vcmp.ge.f32.partialorder %v1879, 0.0
        %vm1912 = vcmp.ge.f32.partialorder %v1880, 0.0
        %v1913 = vmul.f32 %v1849, 0.01
        %v1914 = vmul.f32 %v1850, 0.01
        %v1915 = vmul.f32 %v1851, 0.01
        %v1916 = vmul.f32 %v1852, 0.01
        %v1917 = vmul.f32 %v1853, 0.01
        %v1918 = vmul.f32 %v1854, 0.01
        %v1919 = vmul.f32 %v1855, 0.01
        %v1920 = vmul.f32 %v1856, 0.01
        %v1921 = vmul.f32 %v1857, 0.01
        %v1922 = vmul.f32 %v1858, 0.01
        %v1923 = vmul.f32 %v1859, 0.01
        %v1924 = vmul.f32 %v1860, 0.01
        %v1925 = vmul.f32 %v1861, 0.01
        %v1926 = vmul.f32 %v1862, 0.01
        %v1927 = vmul.f32 %v1863, 0.01
        %v1928 = vmul.f32 %v1864, 0.01
        %v1929 = vmul.f32 %v1865, 0.01
        %v1930 = vmul.f32 %v1866, 0.01
        %v1931 = vmul.f32 %v1867, 0.01
        %v1932 = vmul.f32 %v1868, 0.01
        %v1933 = vmul.f32 %v1869, 0.01
        %v1934 = vmul.f32 %v1870, 0.01
        %v1935 = vmul.f32 %v1871, 0.01
        %v1936 = vmul.f32 %v1872, 0.01
        %v1937 = vmul.f32 %v1873, 0.01
        %v1938 = vmul.f32 %v1874, 0.01
        %v1939 = vmul.f32 %v1875, 0.01
        %v1940 = vmul.f32 %v1876, 0.01
        %v1941 = vmul.f32 %v1877, 0.01
        %v1942 = vmul.f32 %v1878, 0.01
        %v1943 = vmul.f32 %v1879, 0.01
        %v1944 = vmul.f32 %v1880, 0.01
        %v1945 = vsel %vm1881, %v1849, %v1913
        %v1946 = vsel %vm1882, %v1850, %v1914
        %v1947 = vsel %vm1883, %v1851, %v1915
        %v1948 = vsel %vm1884, %v1852, %v1916
        %v1949 = vsel %vm1885, %v1853, %v1917
        %v1950 = vsel %vm1886, %v1854, %v1918
        %v1951 = vsel %vm1887, %v1855, %v1919
        %v1952 = vsel %vm1888, %v1856, %v1920
        %v1953 = vsel %vm1889, %v1857, %v1921
        %v1954 = vsel %vm1890, %v1858, %v1922
        %v1955 = vsel %vm1891, %v1859, %v1923
        %v1956 = vsel %vm1892, %v1860, %v1924
        %v1957 = vsel %vm1893, %v1861, %v1925
        %v1958 = vsel %vm1894, %v1862, %v1926
        %v1959 = vsel %vm1895, %v1863, %v1927
        %v1960 = vsel %vm1896, %v1864, %v1928
        %v1961 = vsel %vm1897, %v1865, %v1929
        %v1962 = vsel %vm1898, %v1866, %v1930
        %v1963 = vsel %vm1899, %v1867, %v1931
        %v1964 = vsel %vm1900, %v1868, %v1932
        %v1965 = vsel %vm1901, %v1869, %v1933
        %v1966 = vsel %vm1902, %v1870, %v1934
        %v1967 = vsel %vm1903, %v1871, %v1935
        %v1968 = vsel %vm1904, %v1872, %v1936
        %v1969 = vsel %vm1905, %v1873, %v1937
        %v1970 = vsel %vm1906, %v1874, %v1938
        %v1971 = vsel %vm1907, %v1875, %v1939
        %v1972 = vsel %vm1908, %v1876, %v1940
        %v1973 = vsel %vm1909, %v1877, %v1941
        %v1974 = vsel %vm1910, %v1878, %v1942
        %v1975 = vsel %vm1911, %v1879, %v1943
        %v1976 = vsel %vm1912, %v1880, %v1944
        %v1977 = vld [vmem:[%s7] sm:$0xf]
        %v1978 = vpack.c.bf16 %v1946, %v1945
        %v1979 = vpack.c.bf16 %v1948, %v1947
        %v1980 = vpack.c.bf16 %v1950, %v1949
        %v1981 = vpack.c.bf16 %v1952, %v1951
        %v1982 = vpack.c.bf16 %v1954, %v1953
        %v1983 = vpack.c.bf16 %v1956, %v1955
        %v1984 = vpack.c.bf16 %v1958, %v1957
        %v1985 = vpack.c.bf16 %v1960, %v1959
        %v1986 = vpack.c.bf16 %v1962, %v1961
        %v1987 = vpack.c.bf16 %v1964, %v1963
        %v1988 = vpack.c.bf16 %v1966, %v1965
        %v1989 = vpack.c.bf16 %v1968, %v1967
        %v1990 = vpack.c.bf16 %v1970, %v1969
        %v1991 = vpack.c.bf16 %v1972, %v1971
        %v1992 = vpack.c.bf16 %v1974, %v1973
        %v1993 = vpack.c.bf16 %v1976, %v1975
        %s1994 = sld [smem:[#allocation2]]
        %v1995 = vstv %s1994
        %vm1996 = vcmask 523264
        %v1998 = vsel %vm1996, %v1977, 0
        %v2001 = vsel %vm1996, %v1978, 0
        %v2004 = vsel %vm1996, %v1979, 0
        %v2007 = vsel %vm1996, %v1980, 0
        %v2010 = vsel %vm1996, %v1981, 0
        %v2013 = vsel %vm1996, %v1982, 0
        %v2016 = vsel %vm1996, %v1983, 0
        %v2019 = vsel %vm1996, %v1984, 0
        %v2022 = vsel %vm1996, %v1985, 0
        %v2025 = vsel %vm1996, %v1986, 0
        %v2028 = vsel %vm1996, %v1987, 0
        %v2031 = vsel %vm1996, %v1988, 0
        %v2034 = vsel %vm1996, %v1989, 0
        %v2037 = vsel %vm1996, %v1990, 0
        %v2040 = vsel %vm1996, %v1991, 0
        %v2043 = vsel %vm1996, %v1992, 0
        %v2046 = vsel %vm1996, %v1993, 0
        %2048 = vmatprep.subr.bf16.mxu0 0
        %2049 = vmatpush1.bf16.xpose.msra.mxu0 %v2001
        %2050 = vmatprep.subr.bf16.mxu0 0
        %2051 = vmatpush1.bf16.xpose.msra.mxu0 %v2004
        %2052 = vmatprep.subr.bf16.mxu0 0
        %2053 = vmatpush1.bf16.xpose.msra.mxu0 %v2007
        %2054 = vmatprep.subr.bf16.mxu0 0
        %2055 = vmatpush1.bf16.xpose.msra.mxu0 %v2010
        %2056 = vmatprep.subr.bf16.mxu0 0
        %2057 = vmatpush1.bf16.xpose.msra.mxu0 %v2013
        %2058 = vmatprep.subr.bf16.mxu0 0
        %2059 = vmatpush1.bf16.xpose.msra.mxu0 %v2016
        %2060 = vmatprep.subr.bf16.mxu0 0
        %2061 = vmatpush1.bf16.xpose.msra.mxu0 %v2019
        %2062 = vmatprep.subr.bf16.mxu0 0
        %2063 = vmatpush1.bf16.xpose.msra.mxu0 %v2022
        %2064 = vmatprep.subr.bf16.mxu0 0
        %2065 = vmatpush1.bf16.xpose.msra.mxu0 %v2025
        %2066 = vmatprep.subr.bf16.mxu0 0
        %2067 = vmatpush1.bf16.xpose.msra.mxu0 %v2028
        %2068 = vmatprep.subr.bf16.mxu0 0
        %2069 = vmatpush1.bf16.xpose.msra.mxu0 %v2031
        %2070 = vmatprep.subr.bf16.mxu0 0
        %2071 = vmatpush1.bf16.xpose.msra.mxu0 %v2034
        %2072 = vmatprep.subr.bf16.mxu0 0
        %2073 = vmatpush1.bf16.xpose.msra.mxu0 %v2037
        %2074 = vmatprep.subr.bf16.mxu0 0
        %2075 = vmatpush1.bf16.xpose.msra.mxu0 %v2040
        %2076 = vmatprep.subr.bf16.mxu0 0
        %2077 = vmatpush1.bf16.xpose.msra.mxu0 %v2043
        %2078 = vmatprep.subr.bf16.mxu0 0
        %2079 = vmatpush1.bf16.xpose.msra.mxu0 %v2046
        %2080 = vmatprep.mubr.bf16.mxu0 0
        %2081 = vmatmul.mubr.bf16.gmra.mrb[0].mxu0 %v1998
        %v2082 = vpop.f32.mrb[0].mxu0
        %v2083 = vadd.f32 %v1995, %v2082
        %v2084 = vpop.f32.mrb[0].mxu0
        %v2085 = vadd.f32 %v1995, %v2084
        %v2086 = vpop.f32.mrb[0].mxu0
        %v2087 = vpop.f32.mrb[0].mxu0
        %2088 = vdwg.mxu0
        %2089 = vst [vmem:[%s386] sm:$0xff] %v2083
        %2090 = vst [vmem:[%s386 + $0x8] sm:$0xff] %v2085
        %s2091 = sand.u32 %s230, 1
        %s2092 = scalar_lea.sflag [#allocation5], %s2091
        %s2093 = sand.u32 %s230, 1
        %s2094 = smul.addr %s2093, 16
        %s2095 = scalar_lea.vmem [#allocation9], %s2094
        // Predicated region
        $region69: #{tpu_custom_call.1} parent=55 // pred_check
          %p2096 = pneg %p240
        $region70: #{tpu_custom_call.1} parent=55 // pred_check_branch
          %2098 = sbr.rel (%p2096) target = $region72
        $region71: #{tpu_custom_call.1} parent=55 // pred_region
          %s2100 = ssub.s32 256, 256
          %2101 = vsyncadd %s2092, %s2100
          %s2102 = smul.addr %s28, 2
          %s2103 = smul.addr %s2102, 128
          %s2104 = scalar_lea.hbm %s9, %s2103
          %s2106 = sshll.u32 %s2095, 4
          %s2107 = int_to_ptr.vmem [resolvable:$true] %s2106
          %2109 = dma.vmem_to_hbm [thread:$0]  %s2107, 256, %s2104, %s2092
        $region72: #{tpu_custom_call.1} parent=55 // pred_fallthru
          _
      $region56: #{tpu_custom_call.1} parent=5 // pred_fallthru
        _
      %p2110 = scmp.le.s32.totalorder 2, %s23
      // Predicated region
      $region73: #{tpu_custom_call.1} parent=5 // pred_check
        %p2111 = pneg %p2110
      $region74: #{tpu_custom_call.1} parent=5 // pred_check_branch
        %2113 = sbr.rel (%p2111) target = $region76
      $region75: #{tpu_custom_call.1} parent=5 // pred_region
        %s2114 = ssub.s32 %s23, 2
        // Predicated region
        $region77: #{tpu_custom_call.1} parent=75 // pred_check
          %p2115 = pneg %p246
        $region78: #{tpu_custom_call.1} parent=75 // pred_check_branch
          %2117 = sbr.rel (%p2115) target = $region80
        $region79: #{tpu_custom_call.1} parent=75 // pred_region
          %s2118 = sand.u32 %s231, 1
          %s2119 = scalar_lea.sflag [#allocation5], %s2118
          %s2120 = sand.u32 %s231, 1
          %s2121 = smul.addr %s2120, 16
          %s2122 = scalar_lea.vmem [#allocation9], %s2121
          %2123 = dma.done %s2119, 256
        $region80: #{tpu_custom_call.1} parent=75 // pred_fallthru
          _
      $region76: #{tpu_custom_call.1} parent=5 // pred_fallthru
        _
    $region6: #{tpu_custom_call.1} parent=1 // loop_footer
      %s27 = sadd.s32 1, %s23
    $region7: #{tpu_custom_call.1} parent=1 // loop_footer_branch
      %22 = sbr.rel target = $region3
    $region8: #{tpu_custom_call.1} parent=1 // loop_exit
      _
    %2124 = vsyncpa [#allocation4], 1
    %s2125 = scalar_lea.sflag [#allocation4], 1
    %2126 = vsyncpa %s2125, 1
    %2127 = vsyncpa [#allocation7], 1
    %2128 = vsyncpa [#allocation5], 1
    %s2129 = scalar_lea.sflag [#allocation5], 1
    %2130 = vsyncpa %s2129, 1

</llo_original>
